<compile_context>
chip_gen: v5e
topology: v5e:2x2
jax: 0.10.0
libtpu: 0.0.40
codegen_flags: <defaults>
</compile_context>

<pallas_src>
import math
from functools import partial

import numpy as np
import jax
import jax.numpy as jnp
from jax.experimental import pallas as pl
from jax.experimental.pallas import tpu as pltpu


def _decoder_layer_kernel(nhead, matmul_dtype,
                          tgt_ref, mem_ref,
                          sa_w_ref, sa_b_ref, sa_ow_ref, sa_ob_ref,
                          ca_w_ref, ca_b_ref, ca_ow_ref, ca_ob_ref,
                          ln1_g_ref, ln1_b_ref, ln2_g_ref, ln2_b_ref,
                          l1_w_ref, l1_b_ref, l2_w_ref, l2_b_ref,
                          out_ref):
    Nb, L, E = tgt_ref.shape
    S = mem_ref.shape[1]
    hd = E // nhead

    def mm(a, b):
        return jnp.dot(a.astype(matmul_dtype), b.astype(matmul_dtype),
                       preferred_element_type=jnp.float32)

    def bmm(eq, a, b):
        return jnp.einsum(eq, a.astype(matmul_dtype), b.astype(matmul_dtype),
                          preferred_element_type=jnp.float32)

    def layer_norm(x, g, b):
        mu = jnp.mean(x, axis=-1, keepdims=True)
        var = jnp.mean((x - mu) ** 2, axis=-1, keepdims=True)
        return (x - mu) * jax.lax.rsqrt(var + 1e-5) * g + b

    def attention(q3, k3, v3, out_w, out_b):
        # q3: (Nb, Lq, E), k3/v3: (Nb, Skv, E). 1/sqrt(hd) already folded into weights.
        heads = []
        for h in range(nhead):                      # static unrolled, nhead is small
            sl = slice(h * hd, (h + 1) * hd)
            s = bmm('bld,bsd->bls', q3[:, :, sl], k3[:, :, sl])
            s = s - jnp.max(s, axis=-1, keepdims=True)
            p = jnp.exp(s)
            p = p / jnp.sum(p, axis=-1, keepdims=True)
            heads.append(bmm('bls,bsd->bld', p, v3[:, :, sl]))
        o = jnp.concatenate(heads, axis=-1).reshape(Nb * q3.shape[1], E)
        return mm(o, out_w) + out_b                 # single output projection

    tgt2 = tgt_ref[...].reshape(Nb * L, E)          # fold batch into rows
    mem2 = mem_ref[...].reshape(Nb * S, E)

    # ---- self-attention block: fused QKV projection (one wide matmul) ----
    qkv = mm(tgt2, sa_w_ref[...]) + sa_b_ref[...]                 # (Nb*L, 3E)
    q3 = qkv[:, 0 * E:1 * E].reshape(Nb, L, E)
    k3 = qkv[:, 1 * E:2 * E].reshape(Nb, L, E)
    v3 = qkv[:, 2 * E:3 * E].reshape(Nb, L, E)
    sa = attention(q3, k3, v3, sa_ow_ref[...], sa_ob_ref[...])    # (Nb*L, E)
    x = layer_norm(tgt2 + sa, ln1_g_ref[...], ln1_b_ref[...])

    # ---- cross-attention block: Q from x, fused KV from memory ----
    ca_w = ca_w_ref[...]
    ca_b = ca_b_ref[...]
    q3 = (mm(x, ca_w[:, 0:E]) + ca_b[:, 0:E]).reshape(Nb, L, E)
    kv = mm(mem2, ca_w[:, E:3 * E]) + ca_b[:, E:3 * E]            # (Nb*S, 2E)
    k3 = kv[:, 0:E].reshape(Nb, S, E)
    v3 = kv[:, E:2 * E].reshape(Nb, S, E)
    ca = attention(q3, k3, v3, ca_ow_ref[...], ca_ob_ref[...])
    x = layer_norm(x + ca, ln2_g_ref[...], ln2_b_ref[...])

    # ---- feed-forward (no residual / norm3 in the reference forward) ----
    h1 = jnp.maximum(mm(x, l1_w_ref[...]) + l1_b_ref[...], 0.0)
    y = mm(h1, l2_w_ref[...]) + l2_b_ref[...]                     # (Nb*L, last_dim)
    out_ref[...] = y.reshape(Nb, L, -1)


def ptransformer_decoder_layer(tgt, memory, params, nhead, *,
                               num_batch_blocks=1, matmul_dtype=jnp.float32):
    """tgt: (L, N, E), memory: (S, N, E) -> (L, N, last_dim).

    num_batch_blocks: number of grid steps the batch is split into.  Keep 1 for
    v5e/v6e (one fat step); use 2 on v7x so both TensorCores get work.
    matmul_dtype: cast matmul operands (f32 accumulation kept); jnp.bfloat16 doubles
    MXU throughput but loosens tolerance — default f32 to match the reference exactly.
    """
    L, N, E = tgt.shape
    S = memory.shape[0]
    last_dim = params["l2_w"].shape[0]
    assert N % num_batch_blocks == 0
    Nb = N // num_batch_blocks
    scale = 1.0 / math.sqrt(E // nhead)

    # Batch-major activations for the kernel (boundary-only transposes).
    tgt_b = jnp.transpose(tgt, (1, 0, 2))      # (N, L, E)
    mem_b = jnp.transpose(memory, (1, 0, 2))   # (N, S, E)

    def row2(a):                               # keep everything >= 2D on TPU
        return a.reshape(1, -1)

    def prep_in(w, b):
        # PyTorch in_proj (3E, E) -> (E, 3E), 1/sqrt(hd) folded into the Q part.
        w_t = w.T
        w_t = jnp.concatenate([w_t[:, :E] * scale, w_t[:, E:]], axis=1)
        b_f = jnp.concatenate([b[:E] * scale, b[E:]])
        return w_t, row2(b_f)

    sa_w, sa_b = prep_in(params["sa_in_w"], params["sa_in_b"])
    ca_w, ca_b = prep_in(params["ca_in_w"], params["ca_in_b"])

    weight_inputs = [
        sa_w, sa_b, params["sa_out_w"].T, row2(params["sa_out_b"]),
        ca_w, ca_b, params["ca_out_w"].T, row2(params["ca_out_b"]),
        row2(params["ln1_g"]), row2(params["ln1_b"]),
        row2(params["ln2_g"]), row2(params["ln2_b"]),
        params["l1_w"].T, row2(params["l1_b"]),
        params["l2_w"].T, row2(params["l2_b"]),
    ]

    def full_spec(a):
        return pl.BlockSpec(a.shape, lambda b: (0, 0))

    in_specs = [
        pl.BlockSpec((Nb, L, E), lambda b: (b, 0, 0)),
        pl.BlockSpec((Nb, S, E), lambda b: (b, 0, 0)),
    ] + [full_spec(w) for w in weight_inputs]

    out = pl.pallas_call(
        partial(_decoder_layer_kernel, nhead, matmul_dtype),
        out_shape=jax.ShapeDtypeStruct((N, L, last_dim), jnp.float32),
        grid=(num_batch_blocks,),
        in_specs=in_specs,
        out_specs=pl.BlockSpec((Nb, L, last_dim), lambda b: (b, 0, 0)),
        compiler_params=pltpu.CompilerParams(dimension_semantics=("parallel",)),
    )(tgt_b, mem_b, *weight_inputs)
    return jnp.transpose(out, (1, 0, 2))       # back to (L, N, last_dim)


def init_params(key, d_model, nhead, last_dim, ffn=512):
    ks = jax.random.split(key, 14)
    s = 0.05
    p = {}
    p["sa_in_w"] = s * jax.random.normal(ks[0], (3 * d_model, d_model), jnp.float32)
    p["sa_in_b"] = s * jax.random.normal(ks[1], (3 * d_model,), jnp.float32)
    p["sa_out_w"] = s * jax.random.normal(ks[2], (d_model, d_model), jnp.float32)
    p["sa_out_b"] = s * jax.random.normal(ks[3], (d_model,), jnp.float32)
    p["ca_in_w"] = s * jax.random.normal(ks[4], (3 * d_model, d_model), jnp.float32)
    p["ca_in_b"] = s * jax.random.normal(ks[5], (3 * d_model,), jnp.float32)
    p["ca_out_w"] = s * jax.random.normal(ks[6], (d_model, d_model), jnp.float32)
    p["ca_out_b"] = s * jax.random.normal(ks[7], (d_model,), jnp.float32)
    p["ln1_g"] = 1.0 + s * jax.random.normal(ks[8], (d_model,), jnp.float32)
    p["ln1_b"] = s * jax.random.normal(ks[9], (d_model,), jnp.float32)
    p["ln2_g"] = 1.0 + s * jax.random.normal(ks[10], (d_model,), jnp.float32)
    p["ln2_b"] = s * jax.random.normal(ks[11], (d_model,), jnp.float32)
    p["l1_w"] = s * jax.random.normal(ks[12], (ffn, d_model), jnp.float32)
    p["l1_b"] = jnp.zeros((ffn,), jnp.float32)
    p["l2_w"] = s * jax.random.normal(ks[13], (last_dim, ffn), jnp.float32)
    p["l2_b"] = jnp.zeros((last_dim,), jnp.float32)
    return p


def reference(tgt, memory, p, nhead):
    """Pure-JAX replica of the PyTorch forward (eval mode) for verification."""
    def mha(q_src, kv_src, in_w, in_b, out_w, out_b):
        L, N, E = q_src.shape
        S = kv_src.shape[0]
        hd = E // nhead
        q = q_src @ in_w[:E].T + in_b[:E]
        k = kv_src @ in_w[E:2 * E].T + in_b[E:2 * E]
        v = kv_src @ in_w[2 * E:].T + in_b[2 * E:]
        q = q.reshape(L, N * nhead, hd).transpose(1, 0, 2) / math.sqrt(hd)
        k = k.reshape(S, N * nhead, hd).transpose(1, 0, 2)
        v = v.reshape(S, N * nhead, hd).transpose(1, 0, 2)
        a = jax.nn.softmax(jnp.einsum("bld,bsd->bls", q, k), axis=-1)
        o = jnp.einsum("bls,bsd->bld", a, v).transpose(1, 0, 2).reshape(L, N, E)
        return o @ out_w.T + out_b

    def ln(x, g, b):
        mu = x.mean(-1, keepdims=True)
        var = ((x - mu) ** 2).mean(-1, keepdims=True)
        return (x - mu) / jnp.sqrt(var + 1e-5) * g + b

    x = ln(tgt + mha(tgt, tgt, p["sa_in_w"], p["sa_in_b"], p["sa_out_w"], p["sa_out_b"]),
           p["ln1_g"], p["ln1_b"])
    x = ln(x + mha(x, memory, p["ca_in_w"], p["ca_in_b"], p["ca_out_w"], p["ca_out_b"]),
           p["ln2_g"], p["ln2_b"])
    h = jax.nn.relu(x @ p["l1_w"].T + p["l1_b"])
    return h @ p["l2_w"].T + p["l2_b"]


if __name__ == "__main__":
    d_model, nhead, last_dim = 32, 4, 64
    L, S, N = 8, 16, 2

    key = jax.random.PRNGKey(0)
    k1, k2, k3 = jax.random.split(key, 3)
    tgt = jax.random.normal(k1, (L, N, d_model), jnp.float32)
    memory = jax.random.normal(k2, (S, N, d_model), jnp.float32)
    params = init_params(k3, d_model, nhead, last_dim)

    ref = reference(tgt, memory, params, nhead)

    # Default: one fat grid step (all batches folded into matmul rows) -> v5e/v6e.
    out = ptransformer_decoder_layer(tgt, memory, params, nhead)
    out = jax.block_until_ready(out)
    assert out.shape == (L, N, last_dim), out.shape
    np.testing.assert_allclose(np.asarray(out), np.asarray(ref), rtol=2e-4, atol=2e-4)

    # Split batch over a parallel grid axis (v7x: feed both TensorCores).
    out2 = ptransformer_decoder_layer(tgt, memory, params, nhead, num_batch_blocks=2)
    out2 = jax.block_until_ready(out2)
    np.testing.assert_allclose(np.asarray(out2), np.asarray(ref), rtol=2e-4, atol=2e-4)

    print("KERNEL_OK")
</pallas_src>

<mosaic_0001>
module attributes {stable_mosaic.version = 11 : i64} {
  func.func @_decoder_layer_kernel(%arg0: i32, %arg1: memref<2x8x32xf32, #tpu.memory_space<vmem>>, %arg2: memref<2x16x32xf32, #tpu.memory_space<vmem>>, %arg3: memref<32x96xf32, #tpu.memory_space<vmem>>, %arg4: memref<1x96xf32, #tpu.memory_space<vmem>>, %arg5: memref<32x32xf32, #tpu.memory_space<vmem>>, %arg6: memref<1x32xf32, #tpu.memory_space<vmem>>, %arg7: memref<32x96xf32, #tpu.memory_space<vmem>>, %arg8: memref<1x96xf32, #tpu.memory_space<vmem>>, %arg9: memref<32x32xf32, #tpu.memory_space<vmem>>, %arg10: memref<1x32xf32, #tpu.memory_space<vmem>>, %arg11: memref<1x32xf32, #tpu.memory_space<vmem>>, %arg12: memref<1x32xf32, #tpu.memory_space<vmem>>, %arg13: memref<1x32xf32, #tpu.memory_space<vmem>>, %arg14: memref<1x32xf32, #tpu.memory_space<vmem>>, %arg15: memref<32x512xf32, #tpu.memory_space<vmem>>, %arg16: memref<1x512xf32, #tpu.memory_space<vmem>>, %arg17: memref<512x64xf32, #tpu.memory_space<vmem>>, %arg18: memref<1x64xf32, #tpu.memory_space<vmem>>, %arg19: memref<2x8x64xf32, #tpu.memory_space<vmem>>) attributes {dimension_semantics = [#tpu.dimension_semantics<parallel>], iteration_bounds = array<i64: 1>, scalar_prefetch = 0 : i64, scratch_operands = 0 : i64, tpu.core_type = #tpu.core_type<tc>, window_params = [{transform_indices = @transform_0, window_bounds = array<i64: 2, 8, 32>}, {transform_indices = @transform_1, window_bounds = array<i64: 2, 16, 32>}, {pipeline_mode = #tpu.pipeline_mode<synchronous>, transform_indices = @transform_2, window_bounds = array<i64: 32, 96>}, {pipeline_mode = #tpu.pipeline_mode<synchronous>, transform_indices = @transform_3, window_bounds = array<i64: 1, 96>}, {pipeline_mode = #tpu.pipeline_mode<synchronous>, transform_indices = @transform_4, window_bounds = array<i64: 32, 32>}, {pipeline_mode = #tpu.pipeline_mode<synchronous>, transform_indices = @transform_5, window_bounds = array<i64: 1, 32>}, {pipeline_mode = #tpu.pipeline_mode<synchronous>, transform_indices = @transform_6, window_bounds = array<i64: 32, 96>}, {pipeline_mode = #tpu.pipeline_mode<synchronous>, transform_indices = @transform_7, window_bounds = array<i64: 1, 96>}, {pipeline_mode = #tpu.pipeline_mode<synchronous>, transform_indices = @transform_8, window_bounds = array<i64: 32, 32>}, {pipeline_mode = #tpu.pipeline_mode<synchronous>, transform_indices = @transform_9, window_bounds = array<i64: 1, 32>}, {pipeline_mode = #tpu.pipeline_mode<synchronous>, transform_indices = @transform_10, window_bounds = array<i64: 1, 32>}, {pipeline_mode = #tpu.pipeline_mode<synchronous>, transform_indices = @transform_11, window_bounds = array<i64: 1, 32>}, {pipeline_mode = #tpu.pipeline_mode<synchronous>, transform_indices = @transform_12, window_bounds = array<i64: 1, 32>}, {pipeline_mode = #tpu.pipeline_mode<synchronous>, transform_indices = @transform_13, window_bounds = array<i64: 1, 32>}, {pipeline_mode = #tpu.pipeline_mode<synchronous>, transform_indices = @transform_14, window_bounds = array<i64: 32, 512>}, {pipeline_mode = #tpu.pipeline_mode<synchronous>, transform_indices = @transform_15, window_bounds = array<i64: 1, 512>}, {pipeline_mode = #tpu.pipeline_mode<synchronous>, transform_indices = @transform_16, window_bounds = array<i64: 512, 64>}, {pipeline_mode = #tpu.pipeline_mode<synchronous>, transform_indices = @transform_17, window_bounds = array<i64: 1, 64>}, {transform_indices = @transform_18, window_bounds = array<i64: 2, 8, 64>}]} {
    %c0 = arith.constant 0 : index
    %c0_0 = arith.constant 0 : index
    %c0_1 = arith.constant 0 : index
    %0 = vector.load %arg1[%c0, %c0_0, %c0_1] : memref<2x8x32xf32, #tpu.memory_space<vmem>>, vector<2x8x32xf32>
    %1 = vector.shape_cast %0 : vector<2x8x32xf32> to vector<16x32xf32>
    %c0_2 = arith.constant 0 : index
    %c0_3 = arith.constant 0 : index
    %c0_4 = arith.constant 0 : index
    %2 = vector.load %arg2[%c0_2, %c0_3, %c0_4] : memref<2x16x32xf32, #tpu.memory_space<vmem>>, vector<2x16x32xf32>
    %3 = vector.shape_cast %2 : vector<2x16x32xf32> to vector<32x32xf32>
    %c0_5 = arith.constant 0 : index
    %c0_6 = arith.constant 0 : index
    %4 = vector.load %arg3[%c0_5, %c0_6] : memref<32x96xf32, #tpu.memory_space<vmem>>, vector<32x96xf32>
    %cst = arith.constant dense<0.000000e+00> : vector<16x96xf32>
    %5 = tpu.matmul %1, %4, %cst {dimension_numbers = #tpu.dot_dimension_numbers<[1], [0], [0], [1], [0, 0, 1, 1], [], []>} : vector<16x32xf32>, vector<32x96xf32>, vector<16x96xf32> -> vector<16x96xf32>
    %c0_7 = arith.constant 0 : index
    %c0_8 = arith.constant 0 : index
    %6 = vector.load %arg4[%c0_7, %c0_8] : memref<1x96xf32, #tpu.memory_space<vmem>>, vector<1x96xf32>
    %7 = vector.broadcast %6 : vector<1x96xf32> to vector<16x96xf32>
    %8 = arith.addf %5, %7 : vector<16x96xf32>
    %9 = vector.extract_strided_slice %8 {offsets = [0, 0], sizes = [16, 32], strides = [1, 1]} : vector<16x96xf32> to vector<16x32xf32>
    %10 = vector.shape_cast %9 : vector<16x32xf32> to vector<2x8x32xf32>
    %11 = vector.extract_strided_slice %8 {offsets = [0, 32], sizes = [16, 32], strides = [1, 1]} : vector<16x96xf32> to vector<16x32xf32>
    %12 = vector.shape_cast %11 : vector<16x32xf32> to vector<2x8x32xf32>
    %13 = vector.extract_strided_slice %8 {offsets = [0, 64], sizes = [16, 32], strides = [1, 1]} : vector<16x96xf32> to vector<16x32xf32>
    %14 = vector.shape_cast %13 : vector<16x32xf32> to vector<2x8x32xf32>
    %c0_9 = arith.constant 0 : index
    %c0_10 = arith.constant 0 : index
    %15 = vector.load %arg5[%c0_9, %c0_10] : memref<32x32xf32, #tpu.memory_space<vmem>>, vector<32x32xf32>
    %c0_11 = arith.constant 0 : index
    %c0_12 = arith.constant 0 : index
    %16 = vector.load %arg6[%c0_11, %c0_12] : memref<1x32xf32, #tpu.memory_space<vmem>>, vector<1x32xf32>
    %17 = vector.extract_strided_slice %10 {offsets = [0, 0, 0], sizes = [2, 8, 8], strides = [1, 1, 1]} : vector<2x8x32xf32> to vector<2x8x8xf32>
    %18 = vector.extract_strided_slice %12 {offsets = [0, 0, 0], sizes = [2, 8, 8], strides = [1, 1, 1]} : vector<2x8x32xf32> to vector<2x8x8xf32>
    "tpu.trace_start"() <{level = 10 : i32, message = "bld,bsd->bls"}> : () -> ()
    %cst_13 = arith.constant dense<0.000000e+00> : vector<2x8x8xf32>
    %19 = tpu.matmul %17, %18, %cst_13 {dimension_numbers = #tpu.dot_dimension_numbers<[2], [2], [1], [1], [0, 0, 0, 1, 1, 1], [0], [0]>} : vector<2x8x8xf32>, vector<2x8x8xf32>, vector<2x8x8xf32> -> vector<2x8x8xf32>
    "tpu.trace_stop"() : () -> ()
    %cst_14 = arith.constant dense<0xFF800000> : vector<2x8xf32>
    %20 = vector.multi_reduction <maximumf>, %19, %cst_14 [2] : vector<2x8x8xf32> to vector<2x8xf32>
    %21 = vector.shape_cast %20 : vector<2x8xf32> to vector<2x8x1xf32>
    %22 = vector.broadcast %21 : vector<2x8x1xf32> to vector<2x8x8xf32>
    %23 = arith.subf %19, %22 : vector<2x8x8xf32>
    %24 = math.exp %23 : vector<2x8x8xf32>
    %cst_15 = arith.constant dense<0.000000e+00> : vector<2x8xf32>
    %25 = vector.multi_reduction <add>, %24, %cst_15 [2] : vector<2x8x8xf32> to vector<2x8xf32>
    %26 = vector.shape_cast %25 : vector<2x8xf32> to vector<2x8x1xf32>
    %27 = vector.broadcast %26 : vector<2x8x1xf32> to vector<2x8x8xf32>
    %28 = arith.divf %24, %27 : vector<2x8x8xf32>
    %29 = vector.extract_strided_slice %14 {offsets = [0, 0, 0], sizes = [2, 8, 8], strides = [1, 1, 1]} : vector<2x8x32xf32> to vector<2x8x8xf32>
    "tpu.trace_start"() <{level = 10 : i32, message = "bls,bsd->bld"}> : () -> ()
    %cst_16 = arith.constant dense<0.000000e+00> : vector<2x8x8xf32>
    %30 = tpu.matmul %28, %29, %cst_16 {dimension_numbers = #tpu.dot_dimension_numbers<[2], [1], [1], [2], [0, 0, 0, 1, 1, 2], [0], [0]>} : vector<2x8x8xf32>, vector<2x8x8xf32>, vector<2x8x8xf32> -> vector<2x8x8xf32>
    "tpu.trace_stop"() : () -> ()
    %31 = vector.extract_strided_slice %10 {offsets = [0, 0, 8], sizes = [2, 8, 8], strides = [1, 1, 1]} : vector<2x8x32xf32> to vector<2x8x8xf32>
    %32 = vector.extract_strided_slice %12 {offsets = [0, 0, 8], sizes = [2, 8, 8], strides = [1, 1, 1]} : vector<2x8x32xf32> to vector<2x8x8xf32>
    "tpu.trace_start"() <{level = 10 : i32, message = "bld,bsd->bls"}> : () -> ()
    %cst_17 = arith.constant dense<0.000000e+00> : vector<2x8x8xf32>
    %33 = tpu.matmul %31, %32, %cst_17 {dimension_numbers = #tpu.dot_dimension_numbers<[2], [2], [1], [1], [0, 0, 0, 1, 1, 1], [0], [0]>} : vector<2x8x8xf32>, vector<2x8x8xf32>, vector<2x8x8xf32> -> vector<2x8x8xf32>
    "tpu.trace_stop"() : () -> ()
    %cst_18 = arith.constant dense<0xFF800000> : vector<2x8xf32>
    %34 = vector.multi_reduction <maximumf>, %33, %cst_18 [2] : vector<2x8x8xf32> to vector<2x8xf32>
    %35 = vector.shape_cast %34 : vector<2x8xf32> to vector<2x8x1xf32>
    %36 = vector.broadcast %35 : vector<2x8x1xf32> to vector<2x8x8xf32>
    %37 = arith.subf %33, %36 : vector<2x8x8xf32>
    %38 = math.exp %37 : vector<2x8x8xf32>
    %cst_19 = arith.constant dense<0.000000e+00> : vector<2x8xf32>
    %39 = vector.multi_reduction <add>, %38, %cst_19 [2] : vector<2x8x8xf32> to vector<2x8xf32>
    %40 = vector.shape_cast %39 : vector<2x8xf32> to vector<2x8x1xf32>
    %41 = vector.broadcast %40 : vector<2x8x1xf32> to vector<2x8x8xf32>
    %42 = arith.divf %38, %41 : vector<2x8x8xf32>
    %43 = vector.extract_strided_slice %14 {offsets = [0, 0, 8], sizes = [2, 8, 8], strides = [1, 1, 1]} : vector<2x8x32xf32> to vector<2x8x8xf32>
    "tpu.trace_start"() <{level = 10 : i32, message = "bls,bsd->bld"}> : () -> ()
    %cst_20 = arith.constant dense<0.000000e+00> : vector<2x8x8xf32>
    %44 = tpu.matmul %42, %43, %cst_20 {dimension_numbers = #tpu.dot_dimension_numbers<[2], [1], [1], [2], [0, 0, 0, 1, 1, 2], [0], [0]>} : vector<2x8x8xf32>, vector<2x8x8xf32>, vector<2x8x8xf32> -> vector<2x8x8xf32>
    "tpu.trace_stop"() : () -> ()
    %45 = vector.extract_strided_slice %10 {offsets = [0, 0, 16], sizes = [2, 8, 8], strides = [1, 1, 1]} : vector<2x8x32xf32> to vector<2x8x8xf32>
    %46 = vector.extract_strided_slice %12 {offsets = [0, 0, 16], sizes = [2, 8, 8], strides = [1, 1, 1]} : vector<2x8x32xf32> to vector<2x8x8xf32>
    "tpu.trace_start"() <{level = 10 : i32, message = "bld,bsd->bls"}> : () -> ()
    %cst_21 = arith.constant dense<0.000000e+00> : vector<2x8x8xf32>
    %47 = tpu.matmul %45, %46, %cst_21 {dimension_numbers = #tpu.dot_dimension_numbers<[2], [2], [1], [1], [0, 0, 0, 1, 1, 1], [0], [0]>} : vector<2x8x8xf32>, vector<2x8x8xf32>, vector<2x8x8xf32> -> vector<2x8x8xf32>
    "tpu.trace_stop"() : () -> ()
    %cst_22 = arith.constant dense<0xFF800000> : vector<2x8xf32>
    %48 = vector.multi_reduction <maximumf>, %47, %cst_22 [2] : vector<2x8x8xf32> to vector<2x8xf32>
    %49 = vector.shape_cast %48 : vector<2x8xf32> to vector<2x8x1xf32>
    %50 = vector.broadcast %49 : vector<2x8x1xf32> to vector<2x8x8xf32>
    %51 = arith.subf %47, %50 : vector<2x8x8xf32>
    %52 = math.exp %51 : vector<2x8x8xf32>
    %cst_23 = arith.constant dense<0.000000e+00> : vector<2x8xf32>
    %53 = vector.multi_reduction <add>, %52, %cst_23 [2] : vector<2x8x8xf32> to vector<2x8xf32>
    %54 = vector.shape_cast %53 : vector<2x8xf32> to vector<2x8x1xf32>
    %55 = vector.broadcast %54 : vector<2x8x1xf32> to vector<2x8x8xf32>
    %56 = arith.divf %52, %55 : vector<2x8x8xf32>
    %57 = vector.extract_strided_slice %14 {offsets = [0, 0, 16], sizes = [2, 8, 8], strides = [1, 1, 1]} : vector<2x8x32xf32> to vector<2x8x8xf32>
    "tpu.trace_start"() <{level = 10 : i32, message = "bls,bsd->bld"}> : () -> ()
    %cst_24 = arith.constant dense<0.000000e+00> : vector<2x8x8xf32>
    %58 = tpu.matmul %56, %57, %cst_24 {dimension_numbers = #tpu.dot_dimension_numbers<[2], [1], [1], [2], [0, 0, 0, 1, 1, 2], [0], [0]>} : vector<2x8x8xf32>, vector<2x8x8xf32>, vector<2x8x8xf32> -> vector<2x8x8xf32>
    "tpu.trace_stop"() : () -> ()
    %59 = vector.extract_strided_slice %10 {offsets = [0, 0, 24], sizes = [2, 8, 8], strides = [1, 1, 1]} : vector<2x8x32xf32> to vector<2x8x8xf32>
    %60 = vector.extract_strided_slice %12 {offsets = [0, 0, 24], sizes = [2, 8, 8], strides = [1, 1, 1]} : vector<2x8x32xf32> to vector<2x8x8xf32>
    "tpu.trace_start"() <{level = 10 : i32, message = "bld,bsd->bls"}> : () -> ()
    %cst_25 = arith.constant dense<0.000000e+00> : vector<2x8x8xf32>
    %61 = tpu.matmul %59, %60, %cst_25 {dimension_numbers = #tpu.dot_dimension_numbers<[2], [2], [1], [1], [0, 0, 0, 1, 1, 1], [0], [0]>} : vector<2x8x8xf32>, vector<2x8x8xf32>, vector<2x8x8xf32> -> vector<2x8x8xf32>
    "tpu.trace_stop"() : () -> ()
    %cst_26 = arith.constant dense<0xFF800000> : vector<2x8xf32>
    %62 = vector.multi_reduction <maximumf>, %61, %cst_26 [2] : vector<2x8x8xf32> to vector<2x8xf32>
    %63 = vector.shape_cast %62 : vector<2x8xf32> to vector<2x8x1xf32>
    %64 = vector.broadcast %63 : vector<2x8x1xf32> to vector<2x8x8xf32>
    %65 = arith.subf %61, %64 : vector<2x8x8xf32>
    %66 = math.exp %65 : vector<2x8x8xf32>
    %cst_27 = arith.constant dense<0.000000e+00> : vector<2x8xf32>
    %67 = vector.multi_reduction <add>, %66, %cst_27 [2] : vector<2x8x8xf32> to vector<2x8xf32>
    %68 = vector.shape_cast %67 : vector<2x8xf32> to vector<2x8x1xf32>
    %69 = vector.broadcast %68 : vector<2x8x1xf32> to vector<2x8x8xf32>
    %70 = arith.divf %66, %69 : vector<2x8x8xf32>
    %71 = vector.extract_strided_slice %14 {offsets = [0, 0, 24], sizes = [2, 8, 8], strides = [1, 1, 1]} : vector<2x8x32xf32> to vector<2x8x8xf32>
    "tpu.trace_start"() <{level = 10 : i32, message = "bls,bsd->bld"}> : () -> ()
    %cst_28 = arith.constant dense<0.000000e+00> : vector<2x8x8xf32>
    %72 = tpu.matmul %70, %71, %cst_28 {dimension_numbers = #tpu.dot_dimension_numbers<[2], [1], [1], [2], [0, 0, 0, 1, 1, 2], [0], [0]>} : vector<2x8x8xf32>, vector<2x8x8xf32>, vector<2x8x8xf32> -> vector<2x8x8xf32>
    "tpu.trace_stop"() : () -> ()
    %73 = tpu.concatenate %30, %44, %58, %72 in 2 : vector<2x8x8xf32>, vector<2x8x8xf32>, vector<2x8x8xf32>, vector<2x8x8xf32> -> vector<2x8x32xf32>
    %74 = vector.shape_cast %73 : vector<2x8x32xf32> to vector<16x32xf32>
    %cst_29 = arith.constant dense<0.000000e+00> : vector<16x32xf32>
    %75 = tpu.matmul %74, %15, %cst_29 {dimension_numbers = #tpu.dot_dimension_numbers<[1], [0], [0], [1], [0, 0, 1, 1], [], []>} : vector<16x32xf32>, vector<32x32xf32>, vector<16x32xf32> -> vector<16x32xf32>
    %76 = vector.broadcast %16 : vector<1x32xf32> to vector<16x32xf32>
    %77 = arith.addf %75, %76 : vector<16x32xf32>
    %78 = arith.addf %1, %77 : vector<16x32xf32>
    %c0_30 = arith.constant 0 : index
    %c0_31 = arith.constant 0 : index
    %79 = vector.load %arg11[%c0_30, %c0_31] : memref<1x32xf32, #tpu.memory_space<vmem>>, vector<1x32xf32>
    %c0_32 = arith.constant 0 : index
    %c0_33 = arith.constant 0 : index
    %80 = vector.load %arg12[%c0_32, %c0_33] : memref<1x32xf32, #tpu.memory_space<vmem>>, vector<1x32xf32>
    %cst_34 = arith.constant dense<0.000000e+00> : vector<16xf32>
    %81 = vector.multi_reduction <add>, %78, %cst_34 [1] : vector<16x32xf32> to vector<16xf32>
    %82 = vector.shape_cast %81 : vector<16xf32> to vector<16x1xf32>
    %cst_35 = arith.constant 3.200000e+01 : f32
    %83 = vector.broadcast %cst_35 : f32 to vector<16x1xf32>
    %84 = arith.divf %82, %83 : vector<16x1xf32>
    %85 = vector.broadcast %84 : vector<16x1xf32> to vector<16x32xf32>
    %86 = arith.subf %78, %85 : vector<16x32xf32>
    %87 = arith.mulf %86, %86 : vector<16x32xf32>
    %cst_36 = arith.constant dense<0.000000e+00> : vector<16xf32>
    %88 = vector.multi_reduction <add>, %87, %cst_36 [1] : vector<16x32xf32> to vector<16xf32>
    %89 = vector.shape_cast %88 : vector<16xf32> to vector<16x1xf32>
    %cst_37 = arith.constant 3.200000e+01 : f32
    %90 = vector.broadcast %cst_37 : f32 to vector<16x1xf32>
    %91 = arith.divf %89, %90 : vector<16x1xf32>
    %92 = vector.broadcast %84 : vector<16x1xf32> to vector<16x32xf32>
    %93 = arith.subf %78, %92 : vector<16x32xf32>
    %cst_38 = arith.constant 9.99999974E-6 : f32
    %94 = vector.broadcast %cst_38 : f32 to vector<16x1xf32>
    %95 = arith.addf %91, %94 : vector<16x1xf32>
    %96 = math.rsqrt %95 : vector<16x1xf32>
    %97 = vector.broadcast %96 : vector<16x1xf32> to vector<16x32xf32>
    %98 = arith.mulf %93, %97 : vector<16x32xf32>
    %99 = vector.broadcast %79 : vector<1x32xf32> to vector<16x32xf32>
    %100 = arith.mulf %98, %99 : vector<16x32xf32>
    %101 = vector.broadcast %80 : vector<1x32xf32> to vector<16x32xf32>
    %102 = arith.addf %100, %101 : vector<16x32xf32>
    %c0_39 = arith.constant 0 : index
    %c0_40 = arith.constant 0 : index
    %103 = vector.load %arg7[%c0_39, %c0_40] : memref<32x96xf32, #tpu.memory_space<vmem>>, vector<32x96xf32>
    %c0_41 = arith.constant 0 : index
    %c0_42 = arith.constant 0 : index
    %104 = vector.load %arg8[%c0_41, %c0_42] : memref<1x96xf32, #tpu.memory_space<vmem>>, vector<1x96xf32>
    %105 = vector.extract_strided_slice %103 {offsets = [0, 0], sizes = [32, 32], strides = [1, 1]} : vector<32x96xf32> to vector<32x32xf32>
    %cst_43 = arith.constant dense<0.000000e+00> : vector<16x32xf32>
    %106 = tpu.matmul %102, %105, %cst_43 {dimension_numbers = #tpu.dot_dimension_numbers<[1], [0], [0], [1], [0, 0, 1, 1], [], []>} : vector<16x32xf32>, vector<32x32xf32>, vector<16x32xf32> -> vector<16x32xf32>
    %107 = vector.extract_strided_slice %104 {offsets = [0, 0], sizes = [1, 32], strides = [1, 1]} : vector<1x96xf32> to vector<1x32xf32>
    %108 = vector.broadcast %107 : vector<1x32xf32> to vector<16x32xf32>
    %109 = arith.addf %106, %108 : vector<16x32xf32>
    %110 = vector.shape_cast %109 : vector<16x32xf32> to vector<2x8x32xf32>
    %111 = vector.extract_strided_slice %103 {offsets = [0, 32], sizes = [32, 64], strides = [1, 1]} : vector<32x96xf32> to vector<32x64xf32>
    %cst_44 = arith.constant dense<0.000000e+00> : vector<32x64xf32>
    %112 = tpu.matmul %3, %111, %cst_44 {dimension_numbers = #tpu.dot_dimension_numbers<[1], [0], [0], [1], [0, 0, 1, 1], [], []>} : vector<32x32xf32>, vector<32x64xf32>, vector<32x64xf32> -> vector<32x64xf32>
    %113 = vector.extract_strided_slice %104 {offsets = [0, 32], sizes = [1, 64], strides = [1, 1]} : vector<1x96xf32> to vector<1x64xf32>
    %114 = vector.broadcast %113 : vector<1x64xf32> to vector<32x64xf32>
    %115 = arith.addf %112, %114 : vector<32x64xf32>
    %116 = vector.extract_strided_slice %115 {offsets = [0, 0], sizes = [32, 32], strides = [1, 1]} : vector<32x64xf32> to vector<32x32xf32>
    %117 = vector.shape_cast %116 : vector<32x32xf32> to vector<2x16x32xf32>
    %118 = vector.extract_strided_slice %115 {offsets = [0, 32], sizes = [32, 32], strides = [1, 1]} : vector<32x64xf32> to vector<32x32xf32>
    %119 = vector.shape_cast %118 : vector<32x32xf32> to vector<2x16x32xf32>
    %c0_45 = arith.constant 0 : index
    %c0_46 = arith.constant 0 : index
    %120 = vector.load %arg9[%c0_45, %c0_46] : memref<32x32xf32, #tpu.memory_space<vmem>>, vector<32x32xf32>
    %c0_47 = arith.constant 0 : index
    %c0_48 = arith.constant 0 : index
    %121 = vector.load %arg10[%c0_47, %c0_48] : memref<1x32xf32, #tpu.memory_space<vmem>>, vector<1x32xf32>
    %122 = vector.extract_strided_slice %110 {offsets = [0, 0, 0], sizes = [2, 8, 8], strides = [1, 1, 1]} : vector<2x8x32xf32> to vector<2x8x8xf32>
    %123 = vector.extract_strided_slice %117 {offsets = [0, 0, 0], sizes = [2, 16, 8], strides = [1, 1, 1]} : vector<2x16x32xf32> to vector<2x16x8xf32>
    "tpu.trace_start"() <{level = 10 : i32, message = "bld,bsd->bls"}> : () -> ()
    %cst_49 = arith.constant dense<0.000000e+00> : vector<2x8x16xf32>
    %124 = tpu.matmul %122, %123, %cst_49 {dimension_numbers = #tpu.dot_dimension_numbers<[2], [2], [1], [1], [0, 0, 0, 1, 1, 1], [0], [0]>} : vector<2x8x8xf32>, vector<2x16x8xf32>, vector<2x8x16xf32> -> vector<2x8x16xf32>
    "tpu.trace_stop"() : () -> ()
    %cst_50 = arith.constant dense<0xFF800000> : vector<2x8xf32>
    %125 = vector.multi_reduction <maximumf>, %124, %cst_50 [2] : vector<2x8x16xf32> to vector<2x8xf32>
    %126 = vector.shape_cast %125 : vector<2x8xf32> to vector<2x8x1xf32>
    %127 = vector.broadcast %126 : vector<2x8x1xf32> to vector<2x8x16xf32>
    %128 = arith.subf %124, %127 : vector<2x8x16xf32>
    %129 = math.exp %128 : vector<2x8x16xf32>
    %cst_51 = arith.constant dense<0.000000e+00> : vector<2x8xf32>
    %130 = vector.multi_reduction <add>, %129, %cst_51 [2] : vector<2x8x16xf32> to vector<2x8xf32>
    %131 = vector.shape_cast %130 : vector<2x8xf32> to vector<2x8x1xf32>
    %132 = vector.broadcast %131 : vector<2x8x1xf32> to vector<2x8x16xf32>
    %133 = arith.divf %129, %132 : vector<2x8x16xf32>
    %134 = vector.extract_strided_slice %119 {offsets = [0, 0, 0], sizes = [2, 16, 8], strides = [1, 1, 1]} : vector<2x16x32xf32> to vector<2x16x8xf32>
    "tpu.trace_start"() <{level = 10 : i32, message = "bls,bsd->bld"}> : () -> ()
    %cst_52 = arith.constant dense<0.000000e+00> : vector<2x8x8xf32>
    %135 = tpu.matmul %133, %134, %cst_52 {dimension_numbers = #tpu.dot_dimension_numbers<[2], [1], [1], [2], [0, 0, 0, 1, 1, 2], [0], [0]>} : vector<2x8x16xf32>, vector<2x16x8xf32>, vector<2x8x8xf32> -> vector<2x8x8xf32>
    "tpu.trace_stop"() : () -> ()
    %136 = vector.extract_strided_slice %110 {offsets = [0, 0, 8], sizes = [2, 8, 8], strides = [1, 1, 1]} : vector<2x8x32xf32> to vector<2x8x8xf32>
    %137 = vector.extract_strided_slice %117 {offsets = [0, 0, 8], sizes = [2, 16, 8], strides = [1, 1, 1]} : vector<2x16x32xf32> to vector<2x16x8xf32>
    "tpu.trace_start"() <{level = 10 : i32, message = "bld,bsd->bls"}> : () -> ()
    %cst_53 = arith.constant dense<0.000000e+00> : vector<2x8x16xf32>
    %138 = tpu.matmul %136, %137, %cst_53 {dimension_numbers = #tpu.dot_dimension_numbers<[2], [2], [1], [1], [0, 0, 0, 1, 1, 1], [0], [0]>} : vector<2x8x8xf32>, vector<2x16x8xf32>, vector<2x8x16xf32> -> vector<2x8x16xf32>
    "tpu.trace_stop"() : () -> ()
    %cst_54 = arith.constant dense<0xFF800000> : vector<2x8xf32>
    %139 = vector.multi_reduction <maximumf>, %138, %cst_54 [2] : vector<2x8x16xf32> to vector<2x8xf32>
    %140 = vector.shape_cast %139 : vector<2x8xf32> to vector<2x8x1xf32>
    %141 = vector.broadcast %140 : vector<2x8x1xf32> to vector<2x8x16xf32>
    %142 = arith.subf %138, %141 : vector<2x8x16xf32>
    %143 = math.exp %142 : vector<2x8x16xf32>
    %cst_55 = arith.constant dense<0.000000e+00> : vector<2x8xf32>
    %144 = vector.multi_reduction <add>, %143, %cst_55 [2] : vector<2x8x16xf32> to vector<2x8xf32>
    %145 = vector.shape_cast %144 : vector<2x8xf32> to vector<2x8x1xf32>
    %146 = vector.broadcast %145 : vector<2x8x1xf32> to vector<2x8x16xf32>
    %147 = arith.divf %143, %146 : vector<2x8x16xf32>
    %148 = vector.extract_strided_slice %119 {offsets = [0, 0, 8], sizes = [2, 16, 8], strides = [1, 1, 1]} : vector<2x16x32xf32> to vector<2x16x8xf32>
    "tpu.trace_start"() <{level = 10 : i32, message = "bls,bsd->bld"}> : () -> ()
    %cst_56 = arith.constant dense<0.000000e+00> : vector<2x8x8xf32>
    %149 = tpu.matmul %147, %148, %cst_56 {dimension_numbers = #tpu.dot_dimension_numbers<[2], [1], [1], [2], [0, 0, 0, 1, 1, 2], [0], [0]>} : vector<2x8x16xf32>, vector<2x16x8xf32>, vector<2x8x8xf32> -> vector<2x8x8xf32>
    "tpu.trace_stop"() : () -> ()
    %150 = vector.extract_strided_slice %110 {offsets = [0, 0, 16], sizes = [2, 8, 8], strides = [1, 1, 1]} : vector<2x8x32xf32> to vector<2x8x8xf32>
    %151 = vector.extract_strided_slice %117 {offsets = [0, 0, 16], sizes = [2, 16, 8], strides = [1, 1, 1]} : vector<2x16x32xf32> to vector<2x16x8xf32>
    "tpu.trace_start"() <{level = 10 : i32, message = "bld,bsd->bls"}> : () -> ()
    %cst_57 = arith.constant dense<0.000000e+00> : vector<2x8x16xf32>
    %152 = tpu.matmul %150, %151, %cst_57 {dimension_numbers = #tpu.dot_dimension_numbers<[2], [2], [1], [1], [0, 0, 0, 1, 1, 1], [0], [0]>} : vector<2x8x8xf32>, vector<2x16x8xf32>, vector<2x8x16xf32> -> vector<2x8x16xf32>
    "tpu.trace_stop"() : () -> ()
    %cst_58 = arith.constant dense<0xFF800000> : vector<2x8xf32>
    %153 = vector.multi_reduction <maximumf>, %152, %cst_58 [2] : vector<2x8x16xf32> to vector<2x8xf32>
    %154 = vector.shape_cast %153 : vector<2x8xf32> to vector<2x8x1xf32>
    %155 = vector.broadcast %154 : vector<2x8x1xf32> to vector<2x8x16xf32>
    %156 = arith.subf %152, %155 : vector<2x8x16xf32>
    %157 = math.exp %156 : vector<2x8x16xf32>
    %cst_59 = arith.constant dense<0.000000e+00> : vector<2x8xf32>
    %158 = vector.multi_reduction <add>, %157, %cst_59 [2] : vector<2x8x16xf32> to vector<2x8xf32>
    %159 = vector.shape_cast %158 : vector<2x8xf32> to vector<2x8x1xf32>
    %160 = vector.broadcast %159 : vector<2x8x1xf32> to vector<2x8x16xf32>
    %161 = arith.divf %157, %160 : vector<2x8x16xf32>
    %162 = vector.extract_strided_slice %119 {offsets = [0, 0, 16], sizes = [2, 16, 8], strides = [1, 1, 1]} : vector<2x16x32xf32> to vector<2x16x8xf32>
    "tpu.trace_start"() <{level = 10 : i32, message = "bls,bsd->bld"}> : () -> ()
    %cst_60 = arith.constant dense<0.000000e+00> : vector<2x8x8xf32>
    %163 = tpu.matmul %161, %162, %cst_60 {dimension_numbers = #tpu.dot_dimension_numbers<[2], [1], [1], [2], [0, 0, 0, 1, 1, 2], [0], [0]>} : vector<2x8x16xf32>, vector<2x16x8xf32>, vector<2x8x8xf32> -> vector<2x8x8xf32>
    "tpu.trace_stop"() : () -> ()
    %164 = vector.extract_strided_slice %110 {offsets = [0, 0, 24], sizes = [2, 8, 8], strides = [1, 1, 1]} : vector<2x8x32xf32> to vector<2x8x8xf32>
    %165 = vector.extract_strided_slice %117 {offsets = [0, 0, 24], sizes = [2, 16, 8], strides = [1, 1, 1]} : vector<2x16x32xf32> to vector<2x16x8xf32>
    "tpu.trace_start"() <{level = 10 : i32, message = "bld,bsd->bls"}> : () -> ()
    %cst_61 = arith.constant dense<0.000000e+00> : vector<2x8x16xf32>
    %166 = tpu.matmul %164, %165, %cst_61 {dimension_numbers = #tpu.dot_dimension_numbers<[2], [2], [1], [1], [0, 0, 0, 1, 1, 1], [0], [0]>} : vector<2x8x8xf32>, vector<2x16x8xf32>, vector<2x8x16xf32> -> vector<2x8x16xf32>
    "tpu.trace_stop"() : () -> ()
    %cst_62 = arith.constant dense<0xFF800000> : vector<2x8xf32>
    %167 = vector.multi_reduction <maximumf>, %166, %cst_62 [2] : vector<2x8x16xf32> to vector<2x8xf32>
    %168 = vector.shape_cast %167 : vector<2x8xf32> to vector<2x8x1xf32>
    %169 = vector.broadcast %168 : vector<2x8x1xf32> to vector<2x8x16xf32>
    %170 = arith.subf %166, %169 : vector<2x8x16xf32>
    %171 = math.exp %170 : vector<2x8x16xf32>
    %cst_63 = arith.constant dense<0.000000e+00> : vector<2x8xf32>
    %172 = vector.multi_reduction <add>, %171, %cst_63 [2] : vector<2x8x16xf32> to vector<2x8xf32>
    %173 = vector.shape_cast %172 : vector<2x8xf32> to vector<2x8x1xf32>
    %174 = vector.broadcast %173 : vector<2x8x1xf32> to vector<2x8x16xf32>
    %175 = arith.divf %171, %174 : vector<2x8x16xf32>
    %176 = vector.extract_strided_slice %119 {offsets = [0, 0, 24], sizes = [2, 16, 8], strides = [1, 1, 1]} : vector<2x16x32xf32> to vector<2x16x8xf32>
    "tpu.trace_start"() <{level = 10 : i32, message = "bls,bsd->bld"}> : () -> ()
    %cst_64 = arith.constant dense<0.000000e+00> : vector<2x8x8xf32>
    %177 = tpu.matmul %175, %176, %cst_64 {dimension_numbers = #tpu.dot_dimension_numbers<[2], [1], [1], [2], [0, 0, 0, 1, 1, 2], [0], [0]>} : vector<2x8x16xf32>, vector<2x16x8xf32>, vector<2x8x8xf32> -> vector<2x8x8xf32>
    "tpu.trace_stop"() : () -> ()
    %178 = tpu.concatenate %135, %149, %163, %177 in 2 : vector<2x8x8xf32>, vector<2x8x8xf32>, vector<2x8x8xf32>, vector<2x8x8xf32> -> vector<2x8x32xf32>
    %179 = vector.shape_cast %178 : vector<2x8x32xf32> to vector<16x32xf32>
    %cst_65 = arith.constant dense<0.000000e+00> : vector<16x32xf32>
    %180 = tpu.matmul %179, %120, %cst_65 {dimension_numbers = #tpu.dot_dimension_numbers<[1], [0], [0], [1], [0, 0, 1, 1], [], []>} : vector<16x32xf32>, vector<32x32xf32>, vector<16x32xf32> -> vector<16x32xf32>
    %181 = vector.broadcast %121 : vector<1x32xf32> to vector<16x32xf32>
    %182 = arith.addf %180, %181 : vector<16x32xf32>
    %183 = arith.addf %102, %182 : vector<16x32xf32>
    %c0_66 = arith.constant 0 : index
    %c0_67 = arith.constant 0 : index
    %184 = vector.load %arg13[%c0_66, %c0_67] : memref<1x32xf32, #tpu.memory_space<vmem>>, vector<1x32xf32>
    %c0_68 = arith.constant 0 : index
    %c0_69 = arith.constant 0 : index
    %185 = vector.load %arg14[%c0_68, %c0_69] : memref<1x32xf32, #tpu.memory_space<vmem>>, vector<1x32xf32>
    %cst_70 = arith.constant dense<0.000000e+00> : vector<16xf32>
    %186 = vector.multi_reduction <add>, %183, %cst_70 [1] : vector<16x32xf32> to vector<16xf32>
    %187 = vector.shape_cast %186 : vector<16xf32> to vector<16x1xf32>
    %cst_71 = arith.constant 3.200000e+01 : f32
    %188 = vector.broadcast %cst_71 : f32 to vector<16x1xf32>
    %189 = arith.divf %187, %188 : vector<16x1xf32>
    %190 = vector.broadcast %189 : vector<16x1xf32> to vector<16x32xf32>
    %191 = arith.subf %183, %190 : vector<16x32xf32>
    %192 = arith.mulf %191, %191 : vector<16x32xf32>
    %cst_72 = arith.constant dense<0.000000e+00> : vector<16xf32>
    %193 = vector.multi_reduction <add>, %192, %cst_72 [1] : vector<16x32xf32> to vector<16xf32>
    %194 = vector.shape_cast %193 : vector<16xf32> to vector<16x1xf32>
    %cst_73 = arith.constant 3.200000e+01 : f32
    %195 = vector.broadcast %cst_73 : f32 to vector<16x1xf32>
    %196 = arith.divf %194, %195 : vector<16x1xf32>
    %197 = vector.broadcast %189 : vector<16x1xf32> to vector<16x32xf32>
    %198 = arith.subf %183, %197 : vector<16x32xf32>
    %cst_74 = arith.constant 9.99999974E-6 : f32
    %199 = vector.broadcast %cst_74 : f32 to vector<16x1xf32>
    %200 = arith.addf %196, %199 : vector<16x1xf32>
    %201 = math.rsqrt %200 : vector<16x1xf32>
    %202 = vector.broadcast %201 : vector<16x1xf32> to vector<16x32xf32>
    %203 = arith.mulf %198, %202 : vector<16x32xf32>
    %204 = vector.broadcast %184 : vector<1x32xf32> to vector<16x32xf32>
    %205 = arith.mulf %203, %204 : vector<16x32xf32>
    %206 = vector.broadcast %185 : vector<1x32xf32> to vector<16x32xf32>
    %207 = arith.addf %205, %206 : vector<16x32xf32>
    %c0_75 = arith.constant 0 : index
    %c0_76 = arith.constant 0 : index
    %208 = vector.load %arg15[%c0_75, %c0_76] : memref<32x512xf32, #tpu.memory_space<vmem>>, vector<32x512xf32>
    %cst_77 = arith.constant dense<0.000000e+00> : vector<16x512xf32>
    %209 = tpu.matmul %207, %208, %cst_77 {dimension_numbers = #tpu.dot_dimension_numbers<[1], [0], [0], [1], [0, 0, 1, 1], [], []>} : vector<16x32xf32>, vector<32x512xf32>, vector<16x512xf32> -> vector<16x512xf32>
    %c0_78 = arith.constant 0 : index
    %c0_79 = arith.constant 0 : index
    %210 = vector.load %arg16[%c0_78, %c0_79] : memref<1x512xf32, #tpu.memory_space<vmem>>, vector<1x512xf32>
    %211 = vector.broadcast %210 : vector<1x512xf32> to vector<16x512xf32>
    %212 = arith.addf %209, %211 : vector<16x512xf32>
    %cst_80 = arith.constant 0.000000e+00 : f32
    %213 = vector.broadcast %cst_80 : f32 to vector<16x512xf32>
    %214 = arith.maximumf %212, %213 : vector<16x512xf32>
    %c0_81 = arith.constant 0 : index
    %c0_82 = arith.constant 0 : index
    %215 = vector.load %arg17[%c0_81, %c0_82] : memref<512x64xf32, #tpu.memory_space<vmem>>, vector<512x64xf32>
    %cst_83 = arith.constant dense<0.000000e+00> : vector<16x64xf32>
    %216 = tpu.matmul %214, %215, %cst_83 {dimension_numbers = #tpu.dot_dimension_numbers<[1], [0], [0], [1], [0, 0, 1, 1], [], []>} : vector<16x512xf32>, vector<512x64xf32>, vector<16x64xf32> -> vector<16x64xf32>
    %c0_84 = arith.constant 0 : index
    %c0_85 = arith.constant 0 : index
    %217 = vector.load %arg18[%c0_84, %c0_85] : memref<1x64xf32, #tpu.memory_space<vmem>>, vector<1x64xf32>
    %218 = vector.broadcast %217 : vector<1x64xf32> to vector<16x64xf32>
    %219 = arith.addf %216, %218 : vector<16x64xf32>
    %220 = vector.shape_cast %219 : vector<16x64xf32> to vector<2x8x64xf32>
    %c0_86 = arith.constant 0 : index
    %c0_87 = arith.constant 0 : index
    %c0_88 = arith.constant 0 : index
    %221 = vector.load %arg19[%c0_86, %c0_87, %c0_88] : memref<2x8x64xf32, #tpu.memory_space<vmem>>, vector<2x8x64xf32>
    tpu.vector_store %arg19[%c0_86, %c0_87, %c0_88], %220 {strides = array<i32>} : memref<2x8x64xf32, #tpu.memory_space<vmem>>, vector<2x8x64xf32>,
    return
  }
  func.func @transform_0(%arg0: i32) -> (i32, i32, i32) {
    %c0_i32 = arith.constant 0 : i32
    %c0_i32_0 = arith.constant 0 : i32
    %c0_i32_1 = arith.constant 0 : i32
    return %arg0, %c0_i32, %c0_i32_0 : i32, i32, i32
  }
  func.func @transform_1(%arg0: i32) -> (i32, i32, i32) {
    %c0_i32 = arith.constant 0 : i32
    %c0_i32_0 = arith.constant 0 : i32
    %c0_i32_1 = arith.constant 0 : i32
    return %arg0, %c0_i32, %c0_i32_0 : i32, i32, i32
  }
  func.func @transform_2(%arg0: i32) -> (i32, i32) {
    %c0_i32 = arith.constant 0 : i32
    %c0_i32_0 = arith.constant 0 : i32
    %c0_i32_1 = arith.constant 0 : i32
    return %c0_i32, %c0_i32_0 : i32, i32
  }
  func.func @transform_3(%arg0: i32) -> (i32, i32) {
    %c0_i32 = arith.constant 0 : i32
    %c0_i32_0 = arith.constant 0 : i32
    %c0_i32_1 = arith.constant 0 : i32
    return %c0_i32, %c0_i32_0 : i32, i32
  }
  func.func @transform_4(%arg0: i32) -> (i32, i32) {
    %c0_i32 = arith.constant 0 : i32
    %c0_i32_0 = arith.constant 0 : i32
    %c0_i32_1 = arith.constant 0 : i32
    return %c0_i32, %c0_i32_0 : i32, i32
  }
  func.func @transform_5(%arg0: i32) -> (i32, i32) {
    %c0_i32 = arith.constant 0 : i32
    %c0_i32_0 = arith.constant 0 : i32
    %c0_i32_1 = arith.constant 0 : i32
    return %c0_i32, %c0_i32_0 : i32, i32
  }
  func.func @transform_6(%arg0: i32) -> (i32, i32) {
    %c0_i32 = arith.constant 0 : i32
    %c0_i32_0 = arith.constant 0 : i32
    %c0_i32_1 = arith.constant 0 : i32
    return %c0_i32, %c0_i32_0 : i32, i32
  }
  func.func @transform_7(%arg0: i32) -> (i32, i32) {
    %c0_i32 = arith.constant 0 : i32
    %c0_i32_0 = arith.constant 0 : i32
    %c0_i32_1 = arith.constant 0 : i32
    return %c0_i32, %c0_i32_0 : i32, i32
  }
  func.func @transform_8(%arg0: i32) -> (i32, i32) {
    %c0_i32 = arith.constant 0 : i32
    %c0_i32_0 = arith.constant 0 : i32
    %c0_i32_1 = arith.constant 0 : i32
    return %c0_i32, %c0_i32_0 : i32, i32
  }
  func.func @transform_9(%arg0: i32) -> (i32, i32) {
    %c0_i32 = arith.constant 0 : i32
    %c0_i32_0 = arith.constant 0 : i32
    %c0_i32_1 = arith.constant 0 : i32
    return %c0_i32, %c0_i32_0 : i32, i32
  }
  func.func @transform_10(%arg0: i32) -> (i32, i32) {
    %c0_i32 = arith.constant 0 : i32
    %c0_i32_0 = arith.constant 0 : i32
    %c0_i32_1 = arith.constant 0 : i32
    return %c0_i32, %c0_i32_0 : i32, i32
  }
  func.func @transform_11(%arg0: i32) -> (i32, i32) {
    %c0_i32 = arith.constant 0 : i32
    %c0_i32_0 = arith.constant 0 : i32
    %c0_i32_1 = arith.constant 0 : i32
    return %c0_i32, %c0_i32_0 : i32, i32
  }
  func.func @transform_12(%arg0: i32) -> (i32, i32) {
    %c0_i32 = arith.constant 0 : i32
    %c0_i32_0 = arith.constant 0 : i32
    %c0_i32_1 = arith.constant 0 : i32
    return %c0_i32, %c0_i32_0 : i32, i32
  }
  func.func @transform_13(%arg0: i32) -> (i32, i32) {
    %c0_i32 = arith.constant 0 : i32
    %c0_i32_0 = arith.constant 0 : i32
    %c0_i32_1 = arith.constant 0 : i32
    return %c0_i32, %c0_i32_0 : i32, i32
  }
  func.func @transform_14(%arg0: i32) -> (i32, i32) {
    %c0_i32 = arith.constant 0 : i32
    %c0_i32_0 = arith.constant 0 : i32
    %c0_i32_1 = arith.constant 0 : i32
    return %c0_i32, %c0_i32_0 : i32, i32
  }
  func.func @transform_15(%arg0: i32) -> (i32, i32) {
    %c0_i32 = arith.constant 0 : i32
    %c0_i32_0 = arith.constant 0 : i32
    %c0_i32_1 = arith.constant 0 : i32
    return %c0_i32, %c0_i32_0 : i32, i32
  }
  func.func @transform_16(%arg0: i32) -> (i32, i32) {
    %c0_i32 = arith.constant 0 : i32
    %c0_i32_0 = arith.constant 0 : i32
    %c0_i32_1 = arith.constant 0 : i32
    return %c0_i32, %c0_i32_0 : i32, i32
  }
  func.func @transform_17(%arg0: i32) -> (i32, i32) {
    %c0_i32 = arith.constant 0 : i32
    %c0_i32_0 = arith.constant 0 : i32
    %c0_i32_1 = arith.constant 0 : i32
    return %c0_i32, %c0_i32_0 : i32, i32
  }
  func.func @transform_18(%arg0: i32) -> (i32, i32, i32) {
    %c0_i32 = arith.constant 0 : i32
    %c0_i32_0 = arith.constant 0 : i32
    %c0_i32_1 = arith.constant 0 : i32
    return %arg0, %c0_i32, %c0_i32_0 : i32, i32, i32
  }
}

</mosaic_0001>

<llo_original>
// kernel: tpu_custom_call.1
$region0: #{tpu_custom_call.1}
  #allocation0 [shape = 'u32[]', space=smem, size = 0x4, offset = 0x4, fixed_abs, tag = 'smem constant byte address 0x4 - core index']
  #allocation1 [shape = 'u32[72,128]{1,0:T(1,128)}', space=vmem, size = 0x9000, scoped, tag = 'internal scratch']
  %s0 = inlined_call_operand.vmem [shape: f32[2,8,32], index: 0, kind: input, shape index: {}]
  %s1 = inlined_call_operand.vmem [shape: f32[2,16,32], index: 1, kind: input, shape index: {}]
  %s2 = inlined_call_operand.vmem [shape: f32[32,96], index: 2, kind: input, shape index: {}]
  %s3 = inlined_call_operand.vmem [shape: f32[1,96], index: 3, kind: input, shape index: {}]
  %s4 = inlined_call_operand.vmem [shape: f32[32,32], index: 4, kind: input, shape index: {}]
  %s5 = inlined_call_operand.vmem [shape: f32[1,32], index: 5, kind: input, shape index: {}]
  %s6 = inlined_call_operand.vmem [shape: f32[32,96], index: 6, kind: input, shape index: {}]
  %s7 = inlined_call_operand.vmem [shape: f32[1,96], index: 7, kind: input, shape index: {}]
  %s8 = inlined_call_operand.vmem [shape: f32[32,32], index: 8, kind: input, shape index: {}]
  %s9 = inlined_call_operand.vmem [shape: f32[1,32], index: 9, kind: input, shape index: {}]
  %s10 = inlined_call_operand.vmem [shape: f32[1,32], index: 10, kind: input, shape index: {}]
  %s11 = inlined_call_operand.vmem [shape: f32[1,32], index: 11, kind: input, shape index: {}]
  %s12 = inlined_call_operand.vmem [shape: f32[1,32], index: 12, kind: input, shape index: {}]
  %s13 = inlined_call_operand.vmem [shape: f32[1,32], index: 13, kind: input, shape index: {}]
  %s14 = inlined_call_operand.vmem [shape: f32[32,512], index: 14, kind: input, shape index: {}]
  %s15 = inlined_call_operand.vmem [shape: f32[1,512], index: 15, kind: input, shape index: {}]
  %s16 = inlined_call_operand.vmem [shape: f32[512,64], index: 16, kind: input, shape index: {}]
  %s17 = inlined_call_operand.vmem [shape: f32[1,64], index: 17, kind: input, shape index: {}]
  %s18 = inlined_call_operand.hbm [shape: f32[2,8,64], index: 18, kind: output, shape index: {}]
  %s19 = sld [smem:[#allocation0]]
  $region82: #{tpu_custom_call.1} parent=0
    _
  %s21 = ssub.s32 1, %s19
  %s22 = scalar_select 0, %s21, %s19
  $region1: #{tpu_custom_call.1} parent=0
    #allocation2 [shape = 'u8[8192]{0}', space=vmem, size = 0x2000, scoped, tag = 'output window, operand 0, single buffered']
    #allocation3 [shape = 's32[1]{0}', space=sflag, size = 0x4, scoped, tag = 'scoped memory for tpu_custom_call.1']
    %23 = vsyncpa [#allocation3], 0
    // Predicated region
    $region2: #{tpu_custom_call.1} parent=1 // pred_check
      _
    $region3: #{tpu_custom_call.1} parent=1 // pred_check_branch
      %25 = sbr.rel (0) target = $region5
    $region4: #{tpu_custom_call.1} parent=1 // pred_region
      _
    $region5: #{tpu_custom_call.1} parent=1 // pred_fallthru
      _
    // Predicated region
    $region6: #{tpu_custom_call.1} parent=1 // pred_check
      _
    $region7: #{tpu_custom_call.1} parent=1 // pred_check_branch
      %27 = sbr.rel (0) target = $region9
    $region8: #{tpu_custom_call.1} parent=1 // pred_region
      _
    $region9: #{tpu_custom_call.1} parent=1 // pred_fallthru
      _
    // Predicated region
    $region10: #{tpu_custom_call.1} parent=1 // pred_check
      _
    $region11: #{tpu_custom_call.1} parent=1 // pred_check_branch
      %29 = sbr.rel (0) target = $region13
    $region12: #{tpu_custom_call.1} parent=1 // pred_region
      _
    $region13: #{tpu_custom_call.1} parent=1 // pred_fallthru
      _
    // Predicated region
    $region14: #{tpu_custom_call.1} parent=1 // pred_check
      _
    $region15: #{tpu_custom_call.1} parent=1 // pred_check_branch
      %31 = sbr.rel (0) target = $region17
    $region16: #{tpu_custom_call.1} parent=1 // pred_region
      _
    $region17: #{tpu_custom_call.1} parent=1 // pred_fallthru
      _
    // Predicated region
    $region18: #{tpu_custom_call.1} parent=1 // pred_check
      _
    $region19: #{tpu_custom_call.1} parent=1 // pred_check_branch
      %33 = sbr.rel (0) target = $region21
    $region20: #{tpu_custom_call.1} parent=1 // pred_region
      _
    $region21: #{tpu_custom_call.1} parent=1 // pred_fallthru
      _
    // Predicated region
    $region22: #{tpu_custom_call.1} parent=1 // pred_check
      _
    $region23: #{tpu_custom_call.1} parent=1 // pred_check_branch
      %35 = sbr.rel (0) target = $region25
    $region24: #{tpu_custom_call.1} parent=1 // pred_region
      _
    $region25: #{tpu_custom_call.1} parent=1 // pred_fallthru
      _
    // Predicated region
    $region26: #{tpu_custom_call.1} parent=1 // pred_check
      _
    $region27: #{tpu_custom_call.1} parent=1 // pred_check_branch
      %37 = sbr.rel (0) target = $region29
    $region28: #{tpu_custom_call.1} parent=1 // pred_region
      _
    $region29: #{tpu_custom_call.1} parent=1 // pred_fallthru
      _
    // Predicated region
    $region30: #{tpu_custom_call.1} parent=1 // pred_check
      _
    $region31: #{tpu_custom_call.1} parent=1 // pred_check_branch
      %39 = sbr.rel (0) target = $region33
    $region32: #{tpu_custom_call.1} parent=1 // pred_region
      _
    $region33: #{tpu_custom_call.1} parent=1 // pred_fallthru
      _
    // Predicated region
    $region34: #{tpu_custom_call.1} parent=1 // pred_check
      _
    $region35: #{tpu_custom_call.1} parent=1 // pred_check_branch
      %41 = sbr.rel (0) target = $region37
    $region36: #{tpu_custom_call.1} parent=1 // pred_region
      _
    $region37: #{tpu_custom_call.1} parent=1 // pred_fallthru
      _
    // Predicated region
    $region38: #{tpu_custom_call.1} parent=1 // pred_check
      _
    $region39: #{tpu_custom_call.1} parent=1 // pred_check_branch
      %43 = sbr.rel (0) target = $region41
    $region40: #{tpu_custom_call.1} parent=1 // pred_region
      _
    $region41: #{tpu_custom_call.1} parent=1 // pred_fallthru
      _
    // Predicated region
    $region42: #{tpu_custom_call.1} parent=1 // pred_check
      _
    $region43: #{tpu_custom_call.1} parent=1 // pred_check_branch
      %45 = sbr.rel (0) target = $region45
    $region44: #{tpu_custom_call.1} parent=1 // pred_region
      _
    $region45: #{tpu_custom_call.1} parent=1 // pred_fallthru
      _
    // Predicated region
    $region46: #{tpu_custom_call.1} parent=1 // pred_check
      _
    $region47: #{tpu_custom_call.1} parent=1 // pred_check_branch
      %47 = sbr.rel (0) target = $region49
    $region48: #{tpu_custom_call.1} parent=1 // pred_region
      _
    $region49: #{tpu_custom_call.1} parent=1 // pred_fallthru
      _
    // Predicated region
    $region50: #{tpu_custom_call.1} parent=1 // pred_check
      _
    $region51: #{tpu_custom_call.1} parent=1 // pred_check_branch
      %49 = sbr.rel (0) target = $region53
    $region52: #{tpu_custom_call.1} parent=1 // pred_region
      _
    $region53: #{tpu_custom_call.1} parent=1 // pred_fallthru
      _
    // Predicated region
    $region54: #{tpu_custom_call.1} parent=1 // pred_check
      _
    $region55: #{tpu_custom_call.1} parent=1 // pred_check_branch
      %51 = sbr.rel (0) target = $region57
    $region56: #{tpu_custom_call.1} parent=1 // pred_region
      _
    $region57: #{tpu_custom_call.1} parent=1 // pred_fallthru
      _
    // Predicated region
    $region58: #{tpu_custom_call.1} parent=1 // pred_check
      _
    $region59: #{tpu_custom_call.1} parent=1 // pred_check_branch
      %53 = sbr.rel (0) target = $region61
    $region60: #{tpu_custom_call.1} parent=1 // pred_region
      _
    $region61: #{tpu_custom_call.1} parent=1 // pred_fallthru
      _
    // Predicated region
    $region62: #{tpu_custom_call.1} parent=1 // pred_check
      _
    $region63: #{tpu_custom_call.1} parent=1 // pred_check_branch
      %55 = sbr.rel (0) target = $region65
    $region64: #{tpu_custom_call.1} parent=1 // pred_region
      _
    $region65: #{tpu_custom_call.1} parent=1 // pred_fallthru
      _
    // Predicated region
    $region66: #{tpu_custom_call.1} parent=1 // pred_check
      _
    $region67: #{tpu_custom_call.1} parent=1 // pred_check_branch
      %57 = sbr.rel (0) target = $region69
    $region68: #{tpu_custom_call.1} parent=1 // pred_region
      _
    $region69: #{tpu_custom_call.1} parent=1 // pred_fallthru
      _
    // Predicated region
    $region70: #{tpu_custom_call.1} parent=1 // pred_check
      _
    $region71: #{tpu_custom_call.1} parent=1 // pred_check_branch
      %59 = sbr.rel (0) target = $region73
    $region72: #{tpu_custom_call.1} parent=1 // pred_region
      _
    $region73: #{tpu_custom_call.1} parent=1 // pred_fallthru
      _
    %v60 = vld [vmem:[%s0] sm:$0xff]
    %v61 = vld [vmem:[%s0 + $0x8] sm:$0xff]
    %v62 = vld [vmem:[%s1] sm:$0xff]
    %v63 = vld [vmem:[%s1 + $0x8] sm:$0xff]
    %v64 = vld [vmem:[%s1 + $0x10] sm:$0xff]
    %v65 = vld [vmem:[%s1 + $0x18] sm:$0xff]
    %v66 = vld [vmem:[%s2] sm:$0xff]
    %v67 = vld [vmem:[%s2 + $0x8] sm:$0xff]
    %v68 = vld [vmem:[%s2 + $0x10] sm:$0xff]
    %v69 = vld [vmem:[%s2 + $0x18] sm:$0xff]
    %v70 = vld [vmem:[%s3] sm:$0x1]
    %v72 = vperm.slane %v70, 0
    %vm74 = vcmask 261120
    %v76 = vsel %vm74, %v60, 0
    %v79 = vsel %vm74, %v61, 0
    %81 = vmatpush.msra.mxu0 0.0
    %82 = vmatpush.msra.mxu0 0.0
    %83 = vmatpush.msra.mxu0 0.0
    %84 = vmatpush.msra.mxu0 0.0
    %85 = vmatpush.msra.mxu0 0.0
    %86 = vmatpush.msra.mxu0 0.0
    %87 = vmatpush.msra.mxu0 0.0
    %88 = vmatpush.msra.mxu0 0.0
    %89 = vmatpush.msra.mxu0 0.0
    %90 = vmatpush.msra.mxu0 0.0
    %91 = vmatpush.msra.mxu0 0.0
    %92 = vmatpush.msra.mxu0 0.0
    %93 = vmatpush.msra.mxu0 %v69
    %94 = vmatpush.msra.mxu0 %v68
    %95 = vmatpush.msra.mxu0 %v67
    %96 = vmatpush.msra.mxu0 %v66
    %97 = vmatmul.f32.gmra.mxu0 %v76
    %v98 = vpop.f32.mrf.mxu0
    %v99 = vadd.f32 %v72, %v98
    %100 = vmatmul.f32.gmra.mxu0 %v79
    %v101 = vpop.f32.mrf.mxu0
    %v102 = vadd.f32 %v72, %v101
    %103 = vdwg.mxu0
    %v104 = vld [vmem:[%s4] sm:$0xff]
    %v105 = vld [vmem:[%s4 + $0x8] sm:$0xff]
    %v106 = vld [vmem:[%s4 + $0x10] sm:$0xff]
    %v107 = vld [vmem:[%s4 + $0x18] sm:$0xff]
    %v108 = vld [vmem:[%s5] sm:$0x1]
    %110 = vrot.lane.b32.xlu0 %v99, 96
    %v111 = vpop.permute.xlu0 %110
    %vm112 = vcmask 64512
    %v113 = vsel %vm112, %v99, 0
    %v115 = vsel %vm112, %v111, 0
    %117 = vmatpush.xpose.msra.mxu0 0.0
    %118 = vmatpush.xpose.msra.mxu0 0.0
    %119 = vmatpush.xpose.msra.mxu0 0.0
    %120 = vmatpush.xpose.msra.mxu0 0.0
    %121 = vmatpush.xpose.msra.mxu0 0.0
    %122 = vmatpush.xpose.msra.mxu0 0.0
    %123 = vmatpush.xpose.msra.mxu0 0.0
    %124 = vmatpush.xpose.msra.mxu0 0.0
    %125 = vmatpush.xpose.msra.mxu0 0.0
    %126 = vmatpush.xpose.msra.mxu0 0.0
    %127 = vmatpush.xpose.msra.mxu0 0.0
    %128 = vmatpush.xpose.msra.mxu0 0.0
    %129 = vmatpush.xpose.msra.mxu0 0.0
    %130 = vmatpush.xpose.msra.mxu0 0.0
    %131 = vmatpush.xpose.msra.mxu0 0.0
    %132 = vmatpush.xpose.msra.mxu0 %v115
    %133 = vmatmul.f32.gmra.mxu0 %v113
    %v134 = vpop.f32.mrf.mxu0
    %v135 = vadd.f32 0.0, %v134
    %136 = vdwg.mxu0
    %138 = vrot.lane.b32.xlu0 %v102, 96
    %v139 = vpop.permute.xlu0 %138
    %v140 = vsel %vm112, %v102, 0
    %v142 = vsel %vm112, %v139, 0
    %144 = vmatpush.xpose.msra.mxu0 0.0
    %145 = vmatpush.xpose.msra.mxu0 0.0
    %146 = vmatpush.xpose.msra.mxu0 0.0
    %147 = vmatpush.xpose.msra.mxu0 0.0
    %148 = vmatpush.xpose.msra.mxu0 0.0
    %149 = vmatpush.xpose.msra.mxu0 0.0
    %150 = vmatpush.xpose.msra.mxu0 0.0
    %151 = vmatpush.xpose.msra.mxu0 0.0
    %152 = vmatpush.xpose.msra.mxu0 0.0
    %153 = vmatpush.xpose.msra.mxu0 0.0
    %154 = vmatpush.xpose.msra.mxu0 0.0
    %155 = vmatpush.xpose.msra.mxu0 0.0
    %156 = vmatpush.xpose.msra.mxu0 0.0
    %157 = vmatpush.xpose.msra.mxu0 0.0
    %158 = vmatpush.xpose.msra.mxu0 0.0
    %159 = vmatpush.xpose.msra.mxu0 %v142
    %160 = vmatmul.f32.gmra.mxu0 %v140
    %v161 = vpop.f32.mrf.mxu0
    %v162 = vadd.f32 0.0, %v161
    %163 = vdwg.mxu0
    %v164 = vsel %vm112, %v135, -inf
    %165 = vmax.xlane.f32.xlu0 %v164
    %v166 = vpop.xlane.xlu0 %165
    %v167 = vsel %vm112, %v162, -inf
    %168 = vmax.xlane.f32.xlu0 %v167
    %v169 = vpop.xlane.xlu0 %168
    %v170 = vsub.f32 %v135, %v166
    %v171 = vsub.f32 %v162, %v169
    %v172 = vmul.f32 %v170, 1.442695
    %v173 = vpow.pop %v172
    %v174 = vmul.f32 %v171, 1.442695
    %v175 = vpow.pop %v174
    %v176 = vsel %vm112, %v173, 0.0
    %177 = vadd.xlane.f32.xlu0 %v176
    %v178 = vpop.xlane.xlu0 %177
    %v179 = vsel %vm112, %v175, 0.0
    %180 = vadd.xlane.f32.xlu0 %v179
    %v181 = vpop.xlane.xlu0 %180
    %v182 = vrcp.pop %v178
    %v183 = vmul.f32 %v178, %v182
    %v184 = vsub.f32 1.0, %v183
    %v185 = vmul.f32 %v182, %v184
    %v186 = vadd.f32 %v182, %v185
    %vm187 = vweird.f32 %v178
    %vm188 = vweird.f32 %v182
    %vm189 = vmor %vm187, %vm188
    %v190 = vsel %vm189, %v182, %v186
    %v191 = vand.u32 2147483647, %v178
    %vm192 = vcmp.eq.f32.partialorder %v191, 8.507059e+37
    %v193 = vand.u32 %v178, 2147483648
    %v194 = vor.u32 1.1754944e-38, %v193
    %v195 = vsel %vm192, %v194, %v190
    %v196 = vmul.f32 %v173, %v195
    %v197 = vrcp.pop %v181
    %v198 = vmul.f32 %v181, %v197
    %v199 = vsub.f32 1.0, %v198
    %v200 = vmul.f32 %v197, %v199
    %v201 = vadd.f32 %v197, %v200
    %vm202 = vweird.f32 %v181
    %vm203 = vweird.f32 %v197
    %vm204 = vmor %vm202, %vm203
    %v205 = vsel %vm204, %v197, %v201
    %v206 = vand.u32 2147483647, %v181
    %vm207 = vcmp.eq.f32.partialorder %v206, 8.507059e+37
    %v208 = vand.u32 %v181, 2147483648
    %v209 = vor.u32 1.1754944e-38, %v208
    %v210 = vsel %vm207, %v209, %v205
    %v211 = vmul.f32 %v175, %v210
    %212 = vrot.lane.b32.xlu0 %v99, 64
    %v213 = vpop.permute.xlu0 %212
    %v216 = vsel %vm112, %v196, 0
    %218 = vmatpush.msra.mxu0 0.0
    %219 = vmatpush.msra.mxu0 0.0
    %220 = vmatpush.msra.mxu0 0.0
    %221 = vmatpush.msra.mxu0 0.0
    %222 = vmatpush.msra.mxu0 0.0
    %223 = vmatpush.msra.mxu0 0.0
    %224 = vmatpush.msra.mxu0 0.0
    %225 = vmatpush.msra.mxu0 0.0
    %226 = vmatpush.msra.mxu0 0.0
    %227 = vmatpush.msra.mxu0 0.0
    %228 = vmatpush.msra.mxu0 0.0
    %229 = vmatpush.msra.mxu0 0.0
    %230 = vmatpush.msra.mxu0 0.0
    %231 = vmatpush.msra.mxu0 0.0
    %232 = vmatpush.msra.mxu0 0.0
    %233 = vmatpush.msra.mxu0 %v213
    %234 = vmatmul.f32.gmra.mxu0 %v216
    %v235 = vpop.f32.mrf.mxu0
    %v236 = vadd.f32 0.0, %v235
    %237 = vdwg.mxu0
    %238 = vrot.lane.b32.xlu0 %v102, 64
    %v239 = vpop.permute.xlu0 %238
    %v242 = vsel %vm112, %v211, 0
    %244 = vmatpush.msra.mxu0 0.0
    %245 = vmatpush.msra.mxu0 0.0
    %246 = vmatpush.msra.mxu0 0.0
    %247 = vmatpush.msra.mxu0 0.0
    %248 = vmatpush.msra.mxu0 0.0
    %249 = vmatpush.msra.mxu0 0.0
    %250 = vmatpush.msra.mxu0 0.0
    %251 = vmatpush.msra.mxu0 0.0
    %252 = vmatpush.msra.mxu0 0.0
    %253 = vmatpush.msra.mxu0 0.0
    %254 = vmatpush.msra.mxu0 0.0
    %255 = vmatpush.msra.mxu0 0.0
    %256 = vmatpush.msra.mxu0 0.0
    %257 = vmatpush.msra.mxu0 0.0
    %258 = vmatpush.msra.mxu0 0.0
    %259 = vmatpush.msra.mxu0 %v239
    %260 = vmatmul.f32.gmra.mxu0 %v242
    %v261 = vpop.f32.mrf.mxu0
    %v262 = vadd.f32 0.0, %v261
    %263 = vdwg.mxu0
    %264 = vrot.lane.b32.xlu0 %v99, 120
    %v265 = vpop.permute.xlu0 %264
    %266 = vrot.lane.b32.xlu0 %v99, 88
    %v267 = vpop.permute.xlu0 %266
    %v268 = vsel %vm112, %v265, 0
    %v270 = vsel %vm112, %v267, 0
    %272 = vmatpush.xpose.msra.mxu0 0.0
    %273 = vmatpush.xpose.msra.mxu0 0.0
    %274 = vmatpush.xpose.msra.mxu0 0.0
    %275 = vmatpush.xpose.msra.mxu0 0.0
    %276 = vmatpush.xpose.msra.mxu0 0.0
    %277 = vmatpush.xpose.msra.mxu0 0.0
    %278 = vmatpush.xpose.msra.mxu0 0.0
    %279 = vmatpush.xpose.msra.mxu0 0.0
    %280 = vmatpush.xpose.msra.mxu0 0.0
    %281 = vmatpush.xpose.msra.mxu0 0.0
    %282 = vmatpush.xpose.msra.mxu0 0.0
    %283 = vmatpush.xpose.msra.mxu0 0.0
    %284 = vmatpush.xpose.msra.mxu0 0.0
    %285 = vmatpush.xpose.msra.mxu0 0.0
    %286 = vmatpush.xpose.msra.mxu0 0.0
    %287 = vmatpush.xpose.msra.mxu0 %v270
    %288 = vmatmul.f32.gmra.mxu0 %v268
    %v289 = vpop.f32.mrf.mxu0
    %v290 = vadd.f32 0.0, %v289
    %291 = vdwg.mxu0
    %292 = vrot.lane.b32.xlu0 %v102, 120
    %v293 = vpop.permute.xlu0 %292
    %294 = vrot.lane.b32.xlu0 %v102, 88
    %v295 = vpop.permute.xlu0 %294
    %v296 = vsel %vm112, %v293, 0
    %v298 = vsel %vm112, %v295, 0
    %300 = vmatpush.xpose.msra.mxu0 0.0
    %301 = vmatpush.xpose.msra.mxu0 0.0
    %302 = vmatpush.xpose.msra.mxu0 0.0
    %303 = vmatpush.xpose.msra.mxu0 0.0
    %304 = vmatpush.xpose.msra.mxu0 0.0
    %305 = vmatpush.xpose.msra.mxu0 0.0
    %306 = vmatpush.xpose.msra.mxu0 0.0
    %307 = vmatpush.xpose.msra.mxu0 0.0
    %308 = vmatpush.xpose.msra.mxu0 0.0
    %309 = vmatpush.xpose.msra.mxu0 0.0
    %310 = vmatpush.xpose.msra.mxu0 0.0
    %311 = vmatpush.xpose.msra.mxu0 0.0
    %312 = vmatpush.xpose.msra.mxu0 0.0
    %313 = vmatpush.xpose.msra.mxu0 0.0
    %314 = vmatpush.xpose.msra.mxu0 0.0
    %315 = vmatpush.xpose.msra.mxu0 %v298
    %316 = vmatmul.f32.gmra.mxu0 %v296
    %v317 = vpop.f32.mrf.mxu0
    %v318 = vadd.f32 0.0, %v317
    %319 = vdwg.mxu0
    %v320 = vsel %vm112, %v290, -inf
    %321 = vmax.xlane.f32.xlu0 %v320
    %v322 = vpop.xlane.xlu0 %321
    %v323 = vsel %vm112, %v318, -inf
    %324 = vmax.xlane.f32.xlu0 %v323
    %v325 = vpop.xlane.xlu0 %324
    %v326 = vsub.f32 %v290, %v322
    %v327 = vsub.f32 %v318, %v325
    %v328 = vmul.f32 %v326, 1.442695
    %v329 = vpow.pop %v328
    %v330 = vmul.f32 %v327, 1.442695
    %v331 = vpow.pop %v330
    %v332 = vsel %vm112, %v329, 0.0
    %333 = vadd.xlane.f32.xlu0 %v332
    %v334 = vpop.xlane.xlu0 %333
    %v335 = vsel %vm112, %v331, 0.0
    %336 = vadd.xlane.f32.xlu0 %v335
    %v337 = vpop.xlane.xlu0 %336
    %v338 = vrcp.pop %v334
    %v339 = vmul.f32 %v334, %v338
    %v340 = vsub.f32 1.0, %v339
    %v341 = vmul.f32 %v338, %v340
    %v342 = vadd.f32 %v338, %v341
    %vm343 = vweird.f32 %v334
    %vm344 = vweird.f32 %v338
    %vm345 = vmor %vm343, %vm344
    %v346 = vsel %vm345, %v338, %v342
    %v347 = vand.u32 2147483647, %v334
    %vm348 = vcmp.eq.f32.partialorder %v347, 8.507059e+37
    %v349 = vand.u32 %v334, 2147483648
    %v350 = vor.u32 1.1754944e-38, %v349
    %v351 = vsel %vm348, %v350, %v346
    %v352 = vmul.f32 %v329, %v351
    %v353 = vrcp.pop %v337
    %v354 = vmul.f32 %v337, %v353
    %v355 = vsub.f32 1.0, %v354
    %v356 = vmul.f32 %v353, %v355
    %v357 = vadd.f32 %v353, %v356
    %vm358 = vweird.f32 %v337
    %vm359 = vweird.f32 %v353
    %vm360 = vmor %vm358, %vm359
    %v361 = vsel %vm360, %v353, %v357
    %v362 = vand.u32 2147483647, %v337
    %vm363 = vcmp.eq.f32.partialorder %v362, 8.507059e+37
    %v364 = vand.u32 %v337, 2147483648
    %v365 = vor.u32 1.1754944e-38, %v364
    %v366 = vsel %vm363, %v365, %v361
    %v367 = vmul.f32 %v331, %v366
    %368 = vrot.lane.b32.xlu0 %v99, 56
    %v369 = vpop.permute.xlu0 %368
    %v372 = vsel %vm112, %v352, 0
    %374 = vmatpush.msra.mxu0 0.0
    %375 = vmatpush.msra.mxu0 0.0
    %376 = vmatpush.msra.mxu0 0.0
    %377 = vmatpush.msra.mxu0 0.0
    %378 = vmatpush.msra.mxu0 0.0
    %379 = vmatpush.msra.mxu0 0.0
    %380 = vmatpush.msra.mxu0 0.0
    %381 = vmatpush.msra.mxu0 0.0
    %382 = vmatpush.msra.mxu0 0.0
    %383 = vmatpush.msra.mxu0 0.0
    %384 = vmatpush.msra.mxu0 0.0
    %385 = vmatpush.msra.mxu0 0.0
    %386 = vmatpush.msra.mxu0 0.0
    %387 = vmatpush.msra.mxu0 0.0
    %388 = vmatpush.msra.mxu0 0.0
    %389 = vmatpush.msra.mxu0 %v369
    %390 = vmatmul.f32.gmra.mxu0 %v372
    %v391 = vpop.f32.mrf.mxu0
    %v392 = vadd.f32 0.0, %v391
    %393 = vdwg.mxu0
    %394 = vrot.lane.b32.xlu0 %v102, 56
    %v395 = vpop.permute.xlu0 %394
    %v398 = vsel %vm112, %v367, 0
    %400 = vmatpush.msra.mxu0 0.0
    %401 = vmatpush.msra.mxu0 0.0
    %402 = vmatpush.msra.mxu0 0.0
    %403 = vmatpush.msra.mxu0 0.0
    %404 = vmatpush.msra.mxu0 0.0
    %405 = vmatpush.msra.mxu0 0.0
    %406 = vmatpush.msra.mxu0 0.0
    %407 = vmatpush.msra.mxu0 0.0
    %408 = vmatpush.msra.mxu0 0.0
    %409 = vmatpush.msra.mxu0 0.0
    %410 = vmatpush.msra.mxu0 0.0
    %411 = vmatpush.msra.mxu0 0.0
    %412 = vmatpush.msra.mxu0 0.0
    %413 = vmatpush.msra.mxu0 0.0
    %414 = vmatpush.msra.mxu0 0.0
    %415 = vmatpush.msra.mxu0 %v395
    %416 = vmatmul.f32.gmra.mxu0 %v398
    %v417 = vpop.f32.mrf.mxu0
    %v418 = vadd.f32 0.0, %v417
    %419 = vdwg.mxu0
    %420 = vrot.lane.b32.xlu0 %v99, 112
    %v421 = vpop.permute.xlu0 %420
    %422 = vrot.lane.b32.xlu0 %v99, 80
    %v423 = vpop.permute.xlu0 %422
    %v424 = vsel %vm112, %v421, 0
    %v426 = vsel %vm112, %v423, 0
    %428 = vmatpush.xpose.msra.mxu0 0.0
    %429 = vmatpush.xpose.msra.mxu0 0.0
    %430 = vmatpush.xpose.msra.mxu0 0.0
    %431 = vmatpush.xpose.msra.mxu0 0.0
    %432 = vmatpush.xpose.msra.mxu0 0.0
    %433 = vmatpush.xpose.msra.mxu0 0.0
    %434 = vmatpush.xpose.msra.mxu0 0.0
    %435 = vmatpush.xpose.msra.mxu0 0.0
    %436 = vmatpush.xpose.msra.mxu0 0.0
    %437 = vmatpush.xpose.msra.mxu0 0.0
    %438 = vmatpush.xpose.msra.mxu0 0.0
    %439 = vmatpush.xpose.msra.mxu0 0.0
    %440 = vmatpush.xpose.msra.mxu0 0.0
    %441 = vmatpush.xpose.msra.mxu0 0.0
    %442 = vmatpush.xpose.msra.mxu0 0.0
    %443 = vmatpush.xpose.msra.mxu0 %v426
    %444 = vmatmul.f32.gmra.mxu0 %v424
    %v445 = vpop.f32.mrf.mxu0
    %v446 = vadd.f32 0.0, %v445
    %447 = vdwg.mxu0
    %448 = vrot.lane.b32.xlu0 %v102, 112
    %v449 = vpop.permute.xlu0 %448
    %450 = vrot.lane.b32.xlu0 %v102, 80
    %v451 = vpop.permute.xlu0 %450
    %v452 = vsel %vm112, %v449, 0
    %v454 = vsel %vm112, %v451, 0
    %456 = vmatpush.xpose.msra.mxu0 0.0
    %457 = vmatpush.xpose.msra.mxu0 0.0
    %458 = vmatpush.xpose.msra.mxu0 0.0
    %459 = vmatpush.xpose.msra.mxu0 0.0
    %460 = vmatpush.xpose.msra.mxu0 0.0
    %461 = vmatpush.xpose.msra.mxu0 0.0
    %462 = vmatpush.xpose.msra.mxu0 0.0
    %463 = vmatpush.xpose.msra.mxu0 0.0
    %464 = vmatpush.xpose.msra.mxu0 0.0
    %465 = vmatpush.xpose.msra.mxu0 0.0
    %466 = vmatpush.xpose.msra.mxu0 0.0
    %467 = vmatpush.xpose.msra.mxu0 0.0
    %468 = vmatpush.xpose.msra.mxu0 0.0
    %469 = vmatpush.xpose.msra.mxu0 0.0
    %470 = vmatpush.xpose.msra.mxu0 0.0
    %471 = vmatpush.xpose.msra.mxu0 %v454
    %472 = vmatmul.f32.gmra.mxu0 %v452
    %v473 = vpop.f32.mrf.mxu0
    %v474 = vadd.f32 0.0, %v473
    %475 = vdwg.mxu0
    %v476 = vsel %vm112, %v446, -inf
    %477 = vmax.xlane.f32.xlu0 %v476
    %v478 = vpop.xlane.xlu0 %477
    %v479 = vsel %vm112, %v474, -inf
    %480 = vmax.xlane.f32.xlu0 %v479
    %v481 = vpop.xlane.xlu0 %480
    %v482 = vsub.f32 %v446, %v478
    %v483 = vsub.f32 %v474, %v481
    %v484 = vmul.f32 %v482, 1.442695
    %v485 = vpow.pop %v484
    %v486 = vmul.f32 %v483, 1.442695
    %v487 = vpow.pop %v486
    %v488 = vsel %vm112, %v485, 0.0
    %489 = vadd.xlane.f32.xlu0 %v488
    %v490 = vpop.xlane.xlu0 %489
    %v491 = vsel %vm112, %v487, 0.0
    %492 = vadd.xlane.f32.xlu0 %v491
    %v493 = vpop.xlane.xlu0 %492
    %v494 = vrcp.pop %v490
    %v495 = vmul.f32 %v490, %v494
    %v496 = vsub.f32 1.0, %v495
    %v497 = vmul.f32 %v494, %v496
    %v498 = vadd.f32 %v494, %v497
    %vm499 = vweird.f32 %v490
    %vm500 = vweird.f32 %v494
    %vm501 = vmor %vm499, %vm500
    %v502 = vsel %vm501, %v494, %v498
    %v503 = vand.u32 2147483647, %v490
    %vm504 = vcmp.eq.f32.partialorder %v503, 8.507059e+37
    %v505 = vand.u32 %v490, 2147483648
    %v506 = vor.u32 1.1754944e-38, %v505
    %v507 = vsel %vm504, %v506, %v502
    %v508 = vmul.f32 %v485, %v507
    %v509 = vrcp.pop %v493
    %v510 = vmul.f32 %v493, %v509
    %v511 = vsub.f32 1.0, %v510
    %v512 = vmul.f32 %v509, %v511
    %v513 = vadd.f32 %v509, %v512
    %vm514 = vweird.f32 %v493
    %vm515 = vweird.f32 %v509
    %vm516 = vmor %vm514, %vm515
    %v517 = vsel %vm516, %v509, %v513
    %v518 = vand.u32 2147483647, %v493
    %vm519 = vcmp.eq.f32.partialorder %v518, 8.507059e+37
    %v520 = vand.u32 %v493, 2147483648
    %v521 = vor.u32 1.1754944e-38, %v520
    %v522 = vsel %vm519, %v521, %v517
    %v523 = vmul.f32 %v487, %v522
    %524 = vrot.lane.b32.xlu0 %v99, 48
    %v525 = vpop.permute.xlu0 %524
    %v528 = vsel %vm112, %v508, 0
    %530 = vmatpush.msra.mxu0 0.0
    %531 = vmatpush.msra.mxu0 0.0
    %532 = vmatpush.msra.mxu0 0.0
    %533 = vmatpush.msra.mxu0 0.0
    %534 = vmatpush.msra.mxu0 0.0
    %535 = vmatpush.msra.mxu0 0.0
    %536 = vmatpush.msra.mxu0 0.0
    %537 = vmatpush.msra.mxu0 0.0
    %538 = vmatpush.msra.mxu0 0.0
    %539 = vmatpush.msra.mxu0 0.0
    %540 = vmatpush.msra.mxu0 0.0
    %541 = vmatpush.msra.mxu0 0.0
    %542 = vmatpush.msra.mxu0 0.0
    %543 = vmatpush.msra.mxu0 0.0
    %544 = vmatpush.msra.mxu0 0.0
    %545 = vmatpush.msra.mxu0 %v525
    %546 = vmatmul.f32.gmra.mxu0 %v528
    %v547 = vpop.f32.mrf.mxu0
    %v548 = vadd.f32 0.0, %v547
    %549 = vdwg.mxu0
    %550 = vrot.lane.b32.xlu0 %v102, 48
    %v551 = vpop.permute.xlu0 %550
    %v554 = vsel %vm112, %v523, 0
    %556 = vmatpush.msra.mxu0 0.0
    %557 = vmatpush.msra.mxu0 0.0
    %558 = vmatpush.msra.mxu0 0.0
    %559 = vmatpush.msra.mxu0 0.0
    %560 = vmatpush.msra.mxu0 0.0
    %561 = vmatpush.msra.mxu0 0.0
    %562 = vmatpush.msra.mxu0 0.0
    %563 = vmatpush.msra.mxu0 0.0
    %564 = vmatpush.msra.mxu0 0.0
    %565 = vmatpush.msra.mxu0 0.0
    %566 = vmatpush.msra.mxu0 0.0
    %567 = vmatpush.msra.mxu0 0.0
    %568 = vmatpush.msra.mxu0 0.0
    %569 = vmatpush.msra.mxu0 0.0
    %570 = vmatpush.msra.mxu0 0.0
    %571 = vmatpush.msra.mxu0 %v551
    %572 = vmatmul.f32.gmra.mxu0 %v554
    %v573 = vpop.f32.mrf.mxu0
    %v574 = vadd.f32 0.0, %v573
    %575 = vdwg.mxu0
    %576 = vrot.lane.b32.xlu0 %v99, 104
    %v577 = vpop.permute.xlu0 %576
    %578 = vrot.lane.b32.xlu0 %v99, 72
    %v579 = vpop.permute.xlu0 %578
    %v580 = vsel %vm112, %v577, 0
    %v582 = vsel %vm112, %v579, 0
    %584 = vmatpush.xpose.msra.mxu0 0.0
    %585 = vmatpush.xpose.msra.mxu0 0.0
    %586 = vmatpush.xpose.msra.mxu0 0.0
    %587 = vmatpush.xpose.msra.mxu0 0.0
    %588 = vmatpush.xpose.msra.mxu0 0.0
    %589 = vmatpush.xpose.msra.mxu0 0.0
    %590 = vmatpush.xpose.msra.mxu0 0.0
    %591 = vmatpush.xpose.msra.mxu0 0.0
    %592 = vmatpush.xpose.msra.mxu0 0.0
    %593 = vmatpush.xpose.msra.mxu0 0.0
    %594 = vmatpush.xpose.msra.mxu0 0.0
    %595 = vmatpush.xpose.msra.mxu0 0.0
    %596 = vmatpush.xpose.msra.mxu0 0.0
    %597 = vmatpush.xpose.msra.mxu0 0.0
    %598 = vmatpush.xpose.msra.mxu0 0.0
    %599 = vmatpush.xpose.msra.mxu0 %v582
    %600 = vmatmul.f32.gmra.mxu0 %v580
    %v601 = vpop.f32.mrf.mxu0
    %v602 = vadd.f32 0.0, %v601
    %603 = vdwg.mxu0
    %604 = vrot.lane.b32.xlu0 %v102, 104
    %v605 = vpop.permute.xlu0 %604
    %606 = vrot.lane.b32.xlu0 %v102, 72
    %v607 = vpop.permute.xlu0 %606
    %v608 = vsel %vm112, %v605, 0
    %v610 = vsel %vm112, %v607, 0
    %612 = vmatpush.xpose.msra.mxu0 0.0
    %613 = vmatpush.xpose.msra.mxu0 0.0
    %614 = vmatpush.xpose.msra.mxu0 0.0
    %615 = vmatpush.xpose.msra.mxu0 0.0
    %616 = vmatpush.xpose.msra.mxu0 0.0
    %617 = vmatpush.xpose.msra.mxu0 0.0
    %618 = vmatpush.xpose.msra.mxu0 0.0
    %619 = vmatpush.xpose.msra.mxu0 0.0
    %620 = vmatpush.xpose.msra.mxu0 0.0
    %621 = vmatpush.xpose.msra.mxu0 0.0
    %622 = vmatpush.xpose.msra.mxu0 0.0
    %623 = vmatpush.xpose.msra.mxu0 0.0
    %624 = vmatpush.xpose.msra.mxu0 0.0
    %625 = vmatpush.xpose.msra.mxu0 0.0
    %626 = vmatpush.xpose.msra.mxu0 0.0
    %627 = vmatpush.xpose.msra.mxu0 %v610
    %628 = vmatmul.f32.gmra.mxu0 %v608
    %v629 = vpop.f32.mrf.mxu0
    %v630 = vadd.f32 0.0, %v629
    %631 = vdwg.mxu0
    %v632 = vsel %vm112, %v602, -inf
    %633 = vmax.xlane.f32.xlu0 %v632
    %v634 = vpop.xlane.xlu0 %633
    %v635 = vsel %vm112, %v630, -inf
    %636 = vmax.xlane.f32.xlu0 %v635
    %v637 = vpop.xlane.xlu0 %636
    %v638 = vsub.f32 %v602, %v634
    %v639 = vsub.f32 %v630, %v637
    %v640 = vmul.f32 %v638, 1.442695
    %v641 = vpow.pop %v640
    %v642 = vmul.f32 %v639, 1.442695
    %v643 = vpow.pop %v642
    %v644 = vsel %vm112, %v641, 0.0
    %645 = vadd.xlane.f32.xlu0 %v644
    %v646 = vpop.xlane.xlu0 %645
    %v647 = vsel %vm112, %v643, 0.0
    %648 = vadd.xlane.f32.xlu0 %v647
    %v649 = vpop.xlane.xlu0 %648
    %v650 = vrcp.pop %v646
    %v651 = vmul.f32 %v646, %v650
    %v652 = vsub.f32 1.0, %v651
    %v653 = vmul.f32 %v650, %v652
    %v654 = vadd.f32 %v650, %v653
    %vm655 = vweird.f32 %v646
    %vm656 = vweird.f32 %v650
    %vm657 = vmor %vm655, %vm656
    %v658 = vsel %vm657, %v650, %v654
    %v659 = vand.u32 2147483647, %v646
    %vm660 = vcmp.eq.f32.partialorder %v659, 8.507059e+37
    %v661 = vand.u32 %v646, 2147483648
    %v662 = vor.u32 1.1754944e-38, %v661
    %v663 = vsel %vm660, %v662, %v658
    %v664 = vmul.f32 %v641, %v663
    %v665 = vrcp.pop %v649
    %v666 = vmul.f32 %v649, %v665
    %v667 = vsub.f32 1.0, %v666
    %v668 = vmul.f32 %v665, %v667
    %v669 = vadd.f32 %v665, %v668
    %vm670 = vweird.f32 %v649
    %vm671 = vweird.f32 %v665
    %vm672 = vmor %vm670, %vm671
    %v673 = vsel %vm672, %v665, %v669
    %v674 = vand.u32 2147483647, %v649
    %vm675 = vcmp.eq.f32.partialorder %v674, 8.507059e+37
    %v676 = vand.u32 %v649, 2147483648
    %v677 = vor.u32 1.1754944e-38, %v676
    %v678 = vsel %vm675, %v677, %v673
    %v679 = vmul.f32 %v643, %v678
    %680 = vrot.lane.b32.xlu0 %v99, 40
    %v681 = vpop.permute.xlu0 %680
    %v684 = vsel %vm112, %v664, 0
    %686 = vmatpush.msra.mxu0 0.0
    %687 = vmatpush.msra.mxu0 0.0
    %688 = vmatpush.msra.mxu0 0.0
    %689 = vmatpush.msra.mxu0 0.0
    %690 = vmatpush.msra.mxu0 0.0
    %691 = vmatpush.msra.mxu0 0.0
    %692 = vmatpush.msra.mxu0 0.0
    %693 = vmatpush.msra.mxu0 0.0
    %694 = vmatpush.msra.mxu0 0.0
    %695 = vmatpush.msra.mxu0 0.0
    %696 = vmatpush.msra.mxu0 0.0
    %697 = vmatpush.msra.mxu0 0.0
    %698 = vmatpush.msra.mxu0 0.0
    %699 = vmatpush.msra.mxu0 0.0
    %700 = vmatpush.msra.mxu0 0.0
    %701 = vmatpush.msra.mxu0 %v681
    %702 = vmatmul.f32.gmra.mxu0 %v684
    %v703 = vpop.f32.mrf.mxu0
    %v704 = vadd.f32 0.0, %v703
    %705 = vdwg.mxu0
    %706 = vrot.lane.b32.xlu0 %v102, 40
    %v707 = vpop.permute.xlu0 %706
    %v710 = vsel %vm112, %v679, 0
    %712 = vmatpush.msra.mxu0 0.0
    %713 = vmatpush.msra.mxu0 0.0
    %714 = vmatpush.msra.mxu0 0.0
    %715 = vmatpush.msra.mxu0 0.0
    %716 = vmatpush.msra.mxu0 0.0
    %717 = vmatpush.msra.mxu0 0.0
    %718 = vmatpush.msra.mxu0 0.0
    %719 = vmatpush.msra.mxu0 0.0
    %720 = vmatpush.msra.mxu0 0.0
    %721 = vmatpush.msra.mxu0 0.0
    %722 = vmatpush.msra.mxu0 0.0
    %723 = vmatpush.msra.mxu0 0.0
    %724 = vmatpush.msra.mxu0 0.0
    %725 = vmatpush.msra.mxu0 0.0
    %726 = vmatpush.msra.mxu0 0.0
    %727 = vmatpush.msra.mxu0 %v707
    %728 = vmatmul.f32.gmra.mxu0 %v710
    %v729 = vpop.f32.mrf.mxu0
    %v730 = vadd.f32 0.0, %v729
    %731 = vdwg.mxu0
    %734 = vrot.lane.b32.xlu0 %v392, 8
    %v735 = vpop.permute.xlu0 %734
    %736 = vrot.lane.b32.xlu0 %v418, 8
    %v737 = vpop.permute.xlu0 %736
    %742 = vrot.lane.b32.xlu0 %v548, 16
    %v743 = vpop.permute.xlu0 %742
    %744 = vrot.lane.b32.xlu0 %v574, 16
    %v745 = vpop.permute.xlu0 %744
    %750 = vrot.lane.b32.xlu0 %v704, 24
    %v751 = vpop.permute.xlu0 %750
    %752 = vrot.lane.b32.xlu0 %v730, 24
    %v753 = vpop.permute.xlu0 %752
    %v756 = vsel %vm112, %v236, %v735
    %v757 = vsel %vm112, %v262, %v737
    %vm758 = vcmask 130048
    %v759 = vsel %vm758, %v756, %v743
    %v760 = vsel %vm758, %v757, %v745
    %vm761 = vcmask 195584
    %v762 = vsel %vm761, %v759, %v751
    %v763 = vsel %vm761, %v760, %v753
    %v765 = vperm.slane %v108, 0
    %v768 = vsel %vm74, %v762, 0
    %v771 = vsel %vm74, %v763, 0
    %773 = vmatpush.msra.mxu0 0.0
    %774 = vmatpush.msra.mxu0 0.0
    %775 = vmatpush.msra.mxu0 0.0
    %776 = vmatpush.msra.mxu0 0.0
    %777 = vmatpush.msra.mxu0 0.0
    %778 = vmatpush.msra.mxu0 0.0
    %779 = vmatpush.msra.mxu0 0.0
    %780 = vmatpush.msra.mxu0 0.0
    %781 = vmatpush.msra.mxu0 0.0
    %782 = vmatpush.msra.mxu0 0.0
    %783 = vmatpush.msra.mxu0 0.0
    %784 = vmatpush.msra.mxu0 0.0
    %785 = vmatpush.msra.mxu0 %v107
    %786 = vmatpush.msra.mxu0 %v106
    %787 = vmatpush.msra.mxu0 %v105
    %788 = vmatpush.msra.mxu0 %v104
    %789 = vmatmul.f32.gmra.mxu0 %v768
    %v790 = vpop.f32.mrf.mxu0
    %v791 = vadd.f32 %v765, %v790
    %792 = vmatmul.f32.gmra.mxu0 %v771
    %v793 = vpop.f32.mrf.mxu0
    %v794 = vadd.f32 %v765, %v793
    %795 = vdwg.mxu0
    %v796 = vadd.f32 %v60, %v791
    %v797 = vadd.f32 %v61, %v794
    %v798 = vld [vmem:[%s10] sm:$0x1]
    %v799 = vld [vmem:[%s11] sm:$0x1]
    %v800 = vsel %vm74, %v796, 0.0
    %801 = vadd.xlane.f32.xlu0 %v800
    %v802 = vpop.xlane.xlu0 %801
    %v803 = vsel %vm74, %v797, 0.0
    %804 = vadd.xlane.f32.xlu0 %v803
    %v805 = vpop.xlane.xlu0 %804
    %v806 = vrcp.pop 32.0
    %v807 = vmul.f32 32.0, %v806
    %v808 = vsub.f32 1.0, %v807
    %v809 = vmul.f32 %v806, %v808
    %v810 = vadd.f32 %v806, %v809
    %vm811 = vweird.f32 %v806
    %v812 = vsel %vm811, %v806, %v810
    %v813 = vmul.f32 %v802, %v812
    %v814 = vmul.f32 %v805, %v812
    %v815 = vsub.f32 %v796, %v813
    %v816 = vsub.f32 %v797, %v814
    %v817 = vmul.f32 %v815, %v815
    %v818 = vmul.f32 %v816, %v816
    %v819 = vsel %vm74, %v817, 0.0
    %820 = vadd.xlane.f32.xlu0 %v819
    %v821 = vpop.xlane.xlu0 %820
    %v822 = vsel %vm74, %v818, 0.0
    %823 = vadd.xlane.f32.xlu0 %v822
    %v824 = vpop.xlane.xlu0 %823
    %v825 = vmul.f32 %v821, %v812
    %v826 = vmul.f32 %v824, %v812
    %v827 = vadd.f32 %v825, 1e-05
    %v828 = vadd.f32 %v826, 1e-05
    %v829 = vrsqrt.pop %v827
    %v830 = vmul.f32 %v829, %v827
    %v831 = vmul.f32 %v830, %v829
    %v832 = vmul.f32 0.5, %v831
    %v833 = vsub.f32 1.5, %v832
    %v834 = vmul.f32 %v829, %v833
    %vm835 = vweird.f32 %v827
    %vm836 = vweird.f32 %v829
    %vm837 = vmor %vm835, %vm836
    %v838 = vsel %vm837, %v829, %v834
    %v839 = vrsqrt.pop %v828
    %v840 = vmul.f32 %v839, %v828
    %v841 = vmul.f32 %v840, %v839
    %v842 = vmul.f32 0.5, %v841
    %v843 = vsub.f32 1.5, %v842
    %v844 = vmul.f32 %v839, %v843
    %vm845 = vweird.f32 %v828
    %vm846 = vweird.f32 %v839
    %vm847 = vmor %vm845, %vm846
    %v848 = vsel %vm847, %v839, %v844
    %v849 = vmul.f32 %v815, %v838
    %v850 = vmul.f32 %v816, %v848
    %v852 = vperm.slane %v798, 0
    %v854 = vmul.f32 %v849, %v852
    %v855 = vmul.f32 %v850, %v852
    %v857 = vperm.slane %v799, 0
    %v859 = vadd.f32 %v854, %v857
    %v860 = vadd.f32 %v855, %v857
    %v861 = vld [vmem:[%s6] sm:$0xff]
    %v862 = vld [vmem:[%s6 + $0x8] sm:$0xff]
    %v863 = vld [vmem:[%s6 + $0x10] sm:$0xff]
    %v864 = vld [vmem:[%s6 + $0x18] sm:$0xff]
    %v865 = vld [vmem:[%s7] sm:$0x1]
    %v867 = vperm.slane %v865, 0
    %v870 = vsel %vm74, %v859, 0
    %v873 = vsel %vm74, %v860, 0
    %875 = vmatpush.msra.mxu0 0.0
    %876 = vmatpush.msra.mxu0 0.0
    %877 = vmatpush.msra.mxu0 0.0
    %878 = vmatpush.msra.mxu0 0.0
    %879 = vmatpush.msra.mxu0 0.0
    %880 = vmatpush.msra.mxu0 0.0
    %881 = vmatpush.msra.mxu0 0.0
    %882 = vmatpush.msra.mxu0 0.0
    %883 = vmatpush.msra.mxu0 0.0
    %884 = vmatpush.msra.mxu0 0.0
    %885 = vmatpush.msra.mxu0 0.0
    %886 = vmatpush.msra.mxu0 0.0
    %887 = vmatpush.msra.mxu0 %v864
    %888 = vmatpush.msra.mxu0 %v863
    %889 = vmatpush.msra.mxu0 %v862
    %890 = vmatpush.msra.mxu0 %v861
    %891 = vmatmul.f32.gmra.mxu0 %v870
    %v892 = vpop.f32.mrf.mxu0
    %v893 = vadd.f32 %v867, %v892
    %894 = vmatmul.f32.gmra.mxu0 %v873
    %v895 = vpop.f32.mrf.mxu0
    %v896 = vadd.f32 %v867, %v895
    %897 = vdwg.mxu0
    %902 = vrot.lane.b32.xlu0 %v861, 96
    %v903 = vpop.permute.xlu0 %902
    %904 = vrot.lane.b32.xlu0 %v862, 96
    %v905 = vpop.permute.xlu0 %904
    %906 = vrot.lane.b32.xlu0 %v863, 96
    %v907 = vpop.permute.xlu0 %906
    %908 = vrot.lane.b32.xlu0 %v864, 96
    %v909 = vpop.permute.xlu0 %908
    %914 = vrot.lane.b32.xlu0 %v867, 96
    %v915 = vpop.permute.xlu0 %914
    %v918 = vsel %vm74, %v62, 0
    %v921 = vsel %vm74, %v63, 0
    %v924 = vsel %vm74, %v64, 0
    %v927 = vsel %vm74, %v65, 0
    %929 = vmatpush.msra.mxu0 0.0
    %930 = vmatpush.msra.mxu0 0.0
    %931 = vmatpush.msra.mxu0 0.0
    %932 = vmatpush.msra.mxu0 0.0
    %933 = vmatpush.msra.mxu0 0.0
    %934 = vmatpush.msra.mxu0 0.0
    %935 = vmatpush.msra.mxu0 0.0
    %936 = vmatpush.msra.mxu0 0.0
    %937 = vmatpush.msra.mxu0 0.0
    %938 = vmatpush.msra.mxu0 0.0
    %939 = vmatpush.msra.mxu0 0.0
    %940 = vmatpush.msra.mxu0 0.0
    %941 = vmatpush.msra.mxu0 %v909
    %942 = vmatpush.msra.mxu0 %v907
    %943 = vmatpush.msra.mxu0 %v905
    %944 = vmatpush.msra.mxu0 %v903
    %945 = vmatmul.f32.gmra.mxu0 %v918
    %v946 = vpop.f32.mrf.mxu0
    %v947 = vadd.f32 %v915, %v946
    %948 = vmatmul.f32.gmra.mxu0 %v921
    %v949 = vpop.f32.mrf.mxu0
    %v950 = vadd.f32 %v915, %v949
    %951 = vmatmul.f32.gmra.mxu0 %v924
    %v952 = vpop.f32.mrf.mxu0
    %v953 = vadd.f32 %v915, %v952
    %954 = vmatmul.f32.gmra.mxu0 %v927
    %v955 = vpop.f32.mrf.mxu0
    %v956 = vadd.f32 %v915, %v955
    %957 = vdwg.mxu0
    %v958 = vld [vmem:[%s8] sm:$0xff]
    %v959 = vld [vmem:[%s8 + $0x8] sm:$0xff]
    %v960 = vld [vmem:[%s8 + $0x10] sm:$0xff]
    %v961 = vld [vmem:[%s8 + $0x18] sm:$0xff]
    %v962 = vld [vmem:[%s9] sm:$0x1]
    %v964 = vsel %vm112, %v893, 0
    %v967 = vsel %vm112, %v947, 0
    %v970 = vsel %vm112, %v950, 0
    %972 = vmatpush.xpose.msra.mxu0 0.0
    %973 = vmatpush.xpose.msra.mxu0 0.0
    %974 = vmatpush.xpose.msra.mxu0 0.0
    %975 = vmatpush.xpose.msra.mxu0 0.0
    %976 = vmatpush.xpose.msra.mxu0 0.0
    %977 = vmatpush.xpose.msra.mxu0 0.0
    %978 = vmatpush.xpose.msra.mxu0 0.0
    %979 = vmatpush.xpose.msra.mxu0 0.0
    %980 = vmatpush.xpose.msra.mxu0 0.0
    %981 = vmatpush.xpose.msra.mxu0 0.0
    %982 = vmatpush.xpose.msra.mxu0 0.0
    %983 = vmatpush.xpose.msra.mxu0 0.0
    %984 = vmatpush.xpose.msra.mxu0 0.0
    %985 = vmatpush.xpose.msra.mxu0 0.0
    %986 = vmatpush.xpose.msra.mxu0 %v970
    %987 = vmatpush.xpose.msra.mxu0 %v967
    %988 = vmatmul.f32.gmra.mxu0 %v964
    %v989 = vpop.f32.mrf.mxu0
    %v990 = vadd.f32 0.0, %v989
    %991 = vdwg.mxu0
    %v993 = vsel %vm112, %v896, 0
    %v996 = vsel %vm112, %v953, 0
    %v999 = vsel %vm112, %v956, 0
    %1001 = vmatpush.xpose.msra.mxu0 0.0
    %1002 = vmatpush.xpose.msra.mxu0 0.0
    %1003 = vmatpush.xpose.msra.mxu0 0.0
    %1004 = vmatpush.xpose.msra.mxu0 0.0
    %1005 = vmatpush.xpose.msra.mxu0 0.0
    %1006 = vmatpush.xpose.msra.mxu0 0.0
    %1007 = vmatpush.xpose.msra.mxu0 0.0
    %1008 = vmatpush.xpose.msra.mxu0 0.0
    %1009 = vmatpush.xpose.msra.mxu0 0.0
    %1010 = vmatpush.xpose.msra.mxu0 0.0
    %1011 = vmatpush.xpose.msra.mxu0 0.0
    %1012 = vmatpush.xpose.msra.mxu0 0.0
    %1013 = vmatpush.xpose.msra.mxu0 0.0
    %1014 = vmatpush.xpose.msra.mxu0 0.0
    %1015 = vmatpush.xpose.msra.mxu0 %v999
    %1016 = vmatpush.xpose.msra.mxu0 %v996
    %1017 = vmatmul.f32.gmra.mxu0 %v993
    %v1018 = vpop.f32.mrf.mxu0
    %v1019 = vadd.f32 0.0, %v1018
    %1020 = vdwg.mxu0
    %v1021 = vsel %vm758, %v990, -inf
    %1022 = vmax.xlane.f32.xlu0 %v1021
    %v1023 = vpop.xlane.xlu0 %1022
    %v1024 = vsel %vm758, %v1019, -inf
    %1025 = vmax.xlane.f32.xlu0 %v1024
    %v1026 = vpop.xlane.xlu0 %1025
    %v1027 = vsub.f32 %v990, %v1023
    %v1028 = vsub.f32 %v1019, %v1026
    %v1029 = vmul.f32 %v1027, 1.442695
    %v1030 = vpow.pop %v1029
    %v1031 = vmul.f32 %v1028, 1.442695
    %v1032 = vpow.pop %v1031
    %v1033 = vsel %vm758, %v1030, 0.0
    %1034 = vadd.xlane.f32.xlu0 %v1033
    %v1035 = vpop.xlane.xlu0 %1034
    %v1036 = vsel %vm758, %v1032, 0.0
    %1037 = vadd.xlane.f32.xlu0 %v1036
    %v1038 = vpop.xlane.xlu0 %1037
    %v1039 = vrcp.pop %v1035
    %v1040 = vmul.f32 %v1035, %v1039
    %v1041 = vsub.f32 1.0, %v1040
    %v1042 = vmul.f32 %v1039, %v1041
    %v1043 = vadd.f32 %v1039, %v1042
    %vm1044 = vweird.f32 %v1035
    %vm1045 = vweird.f32 %v1039
    %vm1046 = vmor %vm1044, %vm1045
    %v1047 = vsel %vm1046, %v1039, %v1043
    %v1048 = vand.u32 2147483647, %v1035
    %vm1049 = vcmp.eq.f32.partialorder %v1048, 8.507059e+37
    %v1050 = vand.u32 %v1035, 2147483648
    %v1051 = vor.u32 1.1754944e-38, %v1050
    %v1052 = vsel %vm1049, %v1051, %v1047
    %v1053 = vmul.f32 %v1030, %v1052
    %v1054 = vrcp.pop %v1038
    %v1055 = vmul.f32 %v1038, %v1054
    %v1056 = vsub.f32 1.0, %v1055
    %v1057 = vmul.f32 %v1054, %v1056
    %v1058 = vadd.f32 %v1054, %v1057
    %vm1059 = vweird.f32 %v1038
    %vm1060 = vweird.f32 %v1054
    %vm1061 = vmor %vm1059, %vm1060
    %v1062 = vsel %vm1061, %v1054, %v1058
    %v1063 = vand.u32 2147483647, %v1038
    %vm1064 = vcmp.eq.f32.partialorder %v1063, 8.507059e+37
    %v1065 = vand.u32 %v1038, 2147483648
    %v1066 = vor.u32 1.1754944e-38, %v1065
    %v1067 = vsel %vm1064, %v1066, %v1062
    %v1068 = vmul.f32 %v1032, %v1067
    %1069 = vrot.lane.b32.xlu0 %v947, 96
    %v1070 = vpop.permute.xlu0 %1069
    %1071 = vrot.lane.b32.xlu0 %v950, 96
    %v1072 = vpop.permute.xlu0 %1071
    %v1076 = vsel %vm758, %v1053, 0
    %1078 = vmatpush.msra.mxu0 0.0
    %1079 = vmatpush.msra.mxu0 0.0
    %1080 = vmatpush.msra.mxu0 0.0
    %1081 = vmatpush.msra.mxu0 0.0
    %1082 = vmatpush.msra.mxu0 0.0
    %1083 = vmatpush.msra.mxu0 0.0
    %1084 = vmatpush.msra.mxu0 0.0
    %1085 = vmatpush.msra.mxu0 0.0
    %1086 = vmatpush.msra.mxu0 0.0
    %1087 = vmatpush.msra.mxu0 0.0
    %1088 = vmatpush.msra.mxu0 0.0
    %1089 = vmatpush.msra.mxu0 0.0
    %1090 = vmatpush.msra.mxu0 0.0
    %1091 = vmatpush.msra.mxu0 0.0
    %1092 = vmatpush.msra.mxu0 %v1072
    %1093 = vmatpush.msra.mxu0 %v1070
    %1094 = vmatmul.f32.gmra.mxu0 %v1076
    %v1095 = vpop.f32.mrf.mxu0
    %v1096 = vadd.f32 0.0, %v1095
    %1097 = vdwg.mxu0
    %1098 = vrot.lane.b32.xlu0 %v953, 96
    %v1099 = vpop.permute.xlu0 %1098
    %1100 = vrot.lane.b32.xlu0 %v956, 96
    %v1101 = vpop.permute.xlu0 %1100
    %v1105 = vsel %vm758, %v1068, 0
    %1107 = vmatpush.msra.mxu0 0.0
    %1108 = vmatpush.msra.mxu0 0.0
    %1109 = vmatpush.msra.mxu0 0.0
    %1110 = vmatpush.msra.mxu0 0.0
    %1111 = vmatpush.msra.mxu0 0.0
    %1112 = vmatpush.msra.mxu0 0.0
    %1113 = vmatpush.msra.mxu0 0.0
    %1114 = vmatpush.msra.mxu0 0.0
    %1115 = vmatpush.msra.mxu0 0.0
    %1116 = vmatpush.msra.mxu0 0.0
    %1117 = vmatpush.msra.mxu0 0.0
    %1118 = vmatpush.msra.mxu0 0.0
    %1119 = vmatpush.msra.mxu0 0.0
    %1120 = vmatpush.msra.mxu0 0.0
    %1121 = vmatpush.msra.mxu0 %v1101
    %1122 = vmatpush.msra.mxu0 %v1099
    %1123 = vmatmul.f32.gmra.mxu0 %v1105
    %v1124 = vpop.f32.mrf.mxu0
    %v1125 = vadd.f32 0.0, %v1124
    %1126 = vdwg.mxu0
    %1127 = vrot.lane.b32.xlu0 %v893, 120
    %v1128 = vpop.permute.xlu0 %1127
    %1129 = vrot.lane.b32.xlu0 %v947, 120
    %v1130 = vpop.permute.xlu0 %1129
    %1131 = vrot.lane.b32.xlu0 %v950, 120
    %v1132 = vpop.permute.xlu0 %1131
    %v1133 = vsel %vm112, %v1128, 0
    %v1135 = vsel %vm112, %v1130, 0
    %v1137 = vsel %vm112, %v1132, 0
    %1139 = vmatpush.xpose.msra.mxu0 0.0
    %1140 = vmatpush.xpose.msra.mxu0 0.0
    %1141 = vmatpush.xpose.msra.mxu0 0.0
    %1142 = vmatpush.xpose.msra.mxu0 0.0
    %1143 = vmatpush.xpose.msra.mxu0 0.0
    %1144 = vmatpush.xpose.msra.mxu0 0.0
    %1145 = vmatpush.xpose.msra.mxu0 0.0
    %1146 = vmatpush.xpose.msra.mxu0 0.0
    %1147 = vmatpush.xpose.msra.mxu0 0.0
    %1148 = vmatpush.xpose.msra.mxu0 0.0
    %1149 = vmatpush.xpose.msra.mxu0 0.0
    %1150 = vmatpush.xpose.msra.mxu0 0.0
    %1151 = vmatpush.xpose.msra.mxu0 0.0
    %1152 = vmatpush.xpose.msra.mxu0 0.0
    %1153 = vmatpush.xpose.msra.mxu0 %v1137
    %1154 = vmatpush.xpose.msra.mxu0 %v1135
    %1155 = vmatmul.f32.gmra.mxu0 %v1133
    %v1156 = vpop.f32.mrf.mxu0
    %v1157 = vadd.f32 0.0, %v1156
    %1158 = vdwg.mxu0
    %1159 = vrot.lane.b32.xlu0 %v896, 120
    %v1160 = vpop.permute.xlu0 %1159
    %1161 = vrot.lane.b32.xlu0 %v953, 120
    %v1162 = vpop.permute.xlu0 %1161
    %1163 = vrot.lane.b32.xlu0 %v956, 120
    %v1164 = vpop.permute.xlu0 %1163
    %v1165 = vsel %vm112, %v1160, 0
    %v1167 = vsel %vm112, %v1162, 0
    %v1169 = vsel %vm112, %v1164, 0
    %1171 = vmatpush.xpose.msra.mxu0 0.0
    %1172 = vmatpush.xpose.msra.mxu0 0.0
    %1173 = vmatpush.xpose.msra.mxu0 0.0
    %1174 = vmatpush.xpose.msra.mxu0 0.0
    %1175 = vmatpush.xpose.msra.mxu0 0.0
    %1176 = vmatpush.xpose.msra.mxu0 0.0
    %1177 = vmatpush.xpose.msra.mxu0 0.0
    %1178 = vmatpush.xpose.msra.mxu0 0.0
    %1179 = vmatpush.xpose.msra.mxu0 0.0
    %1180 = vmatpush.xpose.msra.mxu0 0.0
    %1181 = vmatpush.xpose.msra.mxu0 0.0
    %1182 = vmatpush.xpose.msra.mxu0 0.0
    %1183 = vmatpush.xpose.msra.mxu0 0.0
    %1184 = vmatpush.xpose.msra.mxu0 0.0
    %1185 = vmatpush.xpose.msra.mxu0 %v1169
    %1186 = vmatpush.xpose.msra.mxu0 %v1167
    %1187 = vmatmul.f32.gmra.mxu0 %v1165
    %v1188 = vpop.f32.mrf.mxu0
    %v1189 = vadd.f32 0.0, %v1188
    %1190 = vdwg.mxu0
    %v1191 = vsel %vm758, %v1157, -inf
    %1192 = vmax.xlane.f32.xlu0 %v1191
    %v1193 = vpop.xlane.xlu0 %1192
    %v1194 = vsel %vm758, %v1189, -inf
    %1195 = vmax.xlane.f32.xlu0 %v1194
    %v1196 = vpop.xlane.xlu0 %1195
    %v1197 = vsub.f32 %v1157, %v1193
    %v1198 = vsub.f32 %v1189, %v1196
    %v1199 = vmul.f32 %v1197, 1.442695
    %v1200 = vpow.pop %v1199
    %v1201 = vmul.f32 %v1198, 1.442695
    %v1202 = vpow.pop %v1201
    %v1203 = vsel %vm758, %v1200, 0.0
    %1204 = vadd.xlane.f32.xlu0 %v1203
    %v1205 = vpop.xlane.xlu0 %1204
    %v1206 = vsel %vm758, %v1202, 0.0
    %1207 = vadd.xlane.f32.xlu0 %v1206
    %v1208 = vpop.xlane.xlu0 %1207
    %v1209 = vrcp.pop %v1205
    %v1210 = vmul.f32 %v1205, %v1209
    %v1211 = vsub.f32 1.0, %v1210
    %v1212 = vmul.f32 %v1209, %v1211
    %v1213 = vadd.f32 %v1209, %v1212
    %vm1214 = vweird.f32 %v1205
    %vm1215 = vweird.f32 %v1209
    %vm1216 = vmor %vm1214, %vm1215
    %v1217 = vsel %vm1216, %v1209, %v1213
    %v1218 = vand.u32 2147483647, %v1205
    %vm1219 = vcmp.eq.f32.partialorder %v1218, 8.507059e+37
    %v1220 = vand.u32 %v1205, 2147483648
    %v1221 = vor.u32 1.1754944e-38, %v1220
    %v1222 = vsel %vm1219, %v1221, %v1217
    %v1223 = vmul.f32 %v1200, %v1222
    %v1224 = vrcp.pop %v1208
    %v1225 = vmul.f32 %v1208, %v1224
    %v1226 = vsub.f32 1.0, %v1225
    %v1227 = vmul.f32 %v1224, %v1226
    %v1228 = vadd.f32 %v1224, %v1227
    %vm1229 = vweird.f32 %v1208
    %vm1230 = vweird.f32 %v1224
    %vm1231 = vmor %vm1229, %vm1230
    %v1232 = vsel %vm1231, %v1224, %v1228
    %v1233 = vand.u32 2147483647, %v1208
    %vm1234 = vcmp.eq.f32.partialorder %v1233, 8.507059e+37
    %v1235 = vand.u32 %v1208, 2147483648
    %v1236 = vor.u32 1.1754944e-38, %v1235
    %v1237 = vsel %vm1234, %v1236, %v1232
    %v1238 = vmul.f32 %v1202, %v1237
    %1239 = vrot.lane.b32.xlu0 %v947, 88
    %v1240 = vpop.permute.xlu0 %1239
    %1241 = vrot.lane.b32.xlu0 %v950, 88
    %v1242 = vpop.permute.xlu0 %1241
    %v1246 = vsel %vm758, %v1223, 0
    %1248 = vmatpush.msra.mxu0 0.0
    %1249 = vmatpush.msra.mxu0 0.0
    %1250 = vmatpush.msra.mxu0 0.0
    %1251 = vmatpush.msra.mxu0 0.0
    %1252 = vmatpush.msra.mxu0 0.0
    %1253 = vmatpush.msra.mxu0 0.0
    %1254 = vmatpush.msra.mxu0 0.0
    %1255 = vmatpush.msra.mxu0 0.0
    %1256 = vmatpush.msra.mxu0 0.0
    %1257 = vmatpush.msra.mxu0 0.0
    %1258 = vmatpush.msra.mxu0 0.0
    %1259 = vmatpush.msra.mxu0 0.0
    %1260 = vmatpush.msra.mxu0 0.0
    %1261 = vmatpush.msra.mxu0 0.0
    %1262 = vmatpush.msra.mxu0 %v1242
    %1263 = vmatpush.msra.mxu0 %v1240
    %1264 = vmatmul.f32.gmra.mxu0 %v1246
    %v1265 = vpop.f32.mrf.mxu0
    %v1266 = vadd.f32 0.0, %v1265
    %1267 = vdwg.mxu0
    %1268 = vrot.lane.b32.xlu0 %v953, 88
    %v1269 = vpop.permute.xlu0 %1268
    %1270 = vrot.lane.b32.xlu0 %v956, 88
    %v1271 = vpop.permute.xlu0 %1270
    %v1275 = vsel %vm758, %v1238, 0
    %1277 = vmatpush.msra.mxu0 0.0
    %1278 = vmatpush.msra.mxu0 0.0
    %1279 = vmatpush.msra.mxu0 0.0
    %1280 = vmatpush.msra.mxu0 0.0
    %1281 = vmatpush.msra.mxu0 0.0
    %1282 = vmatpush.msra.mxu0 0.0
    %1283 = vmatpush.msra.mxu0 0.0
    %1284 = vmatpush.msra.mxu0 0.0
    %1285 = vmatpush.msra.mxu0 0.0
    %1286 = vmatpush.msra.mxu0 0.0
    %1287 = vmatpush.msra.mxu0 0.0
    %1288 = vmatpush.msra.mxu0 0.0
    %1289 = vmatpush.msra.mxu0 0.0
    %1290 = vmatpush.msra.mxu0 0.0
    %1291 = vmatpush.msra.mxu0 %v1271
    %1292 = vmatpush.msra.mxu0 %v1269
    %1293 = vmatmul.f32.gmra.mxu0 %v1275
    %v1294 = vpop.f32.mrf.mxu0
    %v1295 = vadd.f32 0.0, %v1294
    %1296 = vdwg.mxu0
    %1297 = vrot.lane.b32.xlu0 %v893, 112
    %v1298 = vpop.permute.xlu0 %1297
    %1299 = vrot.lane.b32.xlu0 %v947, 112
    %v1300 = vpop.permute.xlu0 %1299
    %1301 = vrot.lane.b32.xlu0 %v950, 112
    %v1302 = vpop.permute.xlu0 %1301
    %v1303 = vsel %vm112, %v1298, 0
    %v1305 = vsel %vm112, %v1300, 0
    %v1307 = vsel %vm112, %v1302, 0
    %1309 = vmatpush.xpose.msra.mxu0 0.0
    %1310 = vmatpush.xpose.msra.mxu0 0.0
    %1311 = vmatpush.xpose.msra.mxu0 0.0
    %1312 = vmatpush.xpose.msra.mxu0 0.0
    %1313 = vmatpush.xpose.msra.mxu0 0.0
    %1314 = vmatpush.xpose.msra.mxu0 0.0
    %1315 = vmatpush.xpose.msra.mxu0 0.0
    %1316 = vmatpush.xpose.msra.mxu0 0.0
    %1317 = vmatpush.xpose.msra.mxu0 0.0
    %1318 = vmatpush.xpose.msra.mxu0 0.0
    %1319 = vmatpush.xpose.msra.mxu0 0.0
    %1320 = vmatpush.xpose.msra.mxu0 0.0
    %1321 = vmatpush.xpose.msra.mxu0 0.0
    %1322 = vmatpush.xpose.msra.mxu0 0.0
    %1323 = vmatpush.xpose.msra.mxu0 %v1307
    %1324 = vmatpush.xpose.msra.mxu0 %v1305
    %1325 = vmatmul.f32.gmra.mxu0 %v1303
    %v1326 = vpop.f32.mrf.mxu0
    %v1327 = vadd.f32 0.0, %v1326
    %1328 = vdwg.mxu0
    %1329 = vrot.lane.b32.xlu0 %v896, 112
    %v1330 = vpop.permute.xlu0 %1329
    %1331 = vrot.lane.b32.xlu0 %v953, 112
    %v1332 = vpop.permute.xlu0 %1331
    %1333 = vrot.lane.b32.xlu0 %v956, 112
    %v1334 = vpop.permute.xlu0 %1333
    %v1335 = vsel %vm112, %v1330, 0
    %v1337 = vsel %vm112, %v1332, 0
    %v1339 = vsel %vm112, %v1334, 0
    %1341 = vmatpush.xpose.msra.mxu0 0.0
    %1342 = vmatpush.xpose.msra.mxu0 0.0
    %1343 = vmatpush.xpose.msra.mxu0 0.0
    %1344 = vmatpush.xpose.msra.mxu0 0.0
    %1345 = vmatpush.xpose.msra.mxu0 0.0
    %1346 = vmatpush.xpose.msra.mxu0 0.0
    %1347 = vmatpush.xpose.msra.mxu0 0.0
    %1348 = vmatpush.xpose.msra.mxu0 0.0
    %1349 = vmatpush.xpose.msra.mxu0 0.0
    %1350 = vmatpush.xpose.msra.mxu0 0.0
    %1351 = vmatpush.xpose.msra.mxu0 0.0
    %1352 = vmatpush.xpose.msra.mxu0 0.0
    %1353 = vmatpush.xpose.msra.mxu0 0.0
    %1354 = vmatpush.xpose.msra.mxu0 0.0
    %1355 = vmatpush.xpose.msra.mxu0 %v1339
    %1356 = vmatpush.xpose.msra.mxu0 %v1337
    %1357 = vmatmul.f32.gmra.mxu0 %v1335
    %v1358 = vpop.f32.mrf.mxu0
    %v1359 = vadd.f32 0.0, %v1358
    %1360 = vdwg.mxu0
    %v1361 = vsel %vm758, %v1327, -inf
    %1362 = vmax.xlane.f32.xlu0 %v1361
    %v1363 = vpop.xlane.xlu0 %1362
    %v1364 = vsel %vm758, %v1359, -inf
    %1365 = vmax.xlane.f32.xlu0 %v1364
    %v1366 = vpop.xlane.xlu0 %1365
    %v1367 = vsub.f32 %v1327, %v1363
    %v1368 = vsub.f32 %v1359, %v1366
    %v1369 = vmul.f32 %v1367, 1.442695
    %v1370 = vpow.pop %v1369
    %v1371 = vmul.f32 %v1368, 1.442695
    %v1372 = vpow.pop %v1371
    %v1373 = vsel %vm758, %v1370, 0.0
    %1374 = vadd.xlane.f32.xlu0 %v1373
    %v1375 = vpop.xlane.xlu0 %1374
    %v1376 = vsel %vm758, %v1372, 0.0
    %1377 = vadd.xlane.f32.xlu0 %v1376
    %v1378 = vpop.xlane.xlu0 %1377
    %v1379 = vrcp.pop %v1375
    %v1380 = vmul.f32 %v1375, %v1379
    %v1381 = vsub.f32 1.0, %v1380
    %v1382 = vmul.f32 %v1379, %v1381
    %v1383 = vadd.f32 %v1379, %v1382
    %vm1384 = vweird.f32 %v1375
    %vm1385 = vweird.f32 %v1379
    %vm1386 = vmor %vm1384, %vm1385
    %v1387 = vsel %vm1386, %v1379, %v1383
    %v1388 = vand.u32 2147483647, %v1375
    %vm1389 = vcmp.eq.f32.partialorder %v1388, 8.507059e+37
    %v1390 = vand.u32 %v1375, 2147483648
    %v1391 = vor.u32 1.1754944e-38, %v1390
    %v1392 = vsel %vm1389, %v1391, %v1387
    %v1393 = vmul.f32 %v1370, %v1392
    %v1394 = vrcp.pop %v1378
    %v1395 = vmul.f32 %v1378, %v1394
    %v1396 = vsub.f32 1.0, %v1395
    %v1397 = vmul.f32 %v1394, %v1396
    %v1398 = vadd.f32 %v1394, %v1397
    %vm1399 = vweird.f32 %v1378
    %vm1400 = vweird.f32 %v1394
    %vm1401 = vmor %vm1399, %vm1400
    %v1402 = vsel %vm1401, %v1394, %v1398
    %v1403 = vand.u32 2147483647, %v1378
    %vm1404 = vcmp.eq.f32.partialorder %v1403, 8.507059e+37
    %v1405 = vand.u32 %v1378, 2147483648
    %v1406 = vor.u32 1.1754944e-38, %v1405
    %v1407 = vsel %vm1404, %v1406, %v1402
    %v1408 = vmul.f32 %v1372, %v1407
    %1409 = vrot.lane.b32.xlu0 %v947, 80
    %v1410 = vpop.permute.xlu0 %1409
    %1411 = vrot.lane.b32.xlu0 %v950, 80
    %v1412 = vpop.permute.xlu0 %1411
    %v1416 = vsel %vm758, %v1393, 0
    %1418 = vmatpush.msra.mxu0 0.0
    %1419 = vmatpush.msra.mxu0 0.0
    %1420 = vmatpush.msra.mxu0 0.0
    %1421 = vmatpush.msra.mxu0 0.0
    %1422 = vmatpush.msra.mxu0 0.0
    %1423 = vmatpush.msra.mxu0 0.0
    %1424 = vmatpush.msra.mxu0 0.0
    %1425 = vmatpush.msra.mxu0 0.0
    %1426 = vmatpush.msra.mxu0 0.0
    %1427 = vmatpush.msra.mxu0 0.0
    %1428 = vmatpush.msra.mxu0 0.0
    %1429 = vmatpush.msra.mxu0 0.0
    %1430 = vmatpush.msra.mxu0 0.0
    %1431 = vmatpush.msra.mxu0 0.0
    %1432 = vmatpush.msra.mxu0 %v1412
    %1433 = vmatpush.msra.mxu0 %v1410
    %1434 = vmatmul.f32.gmra.mxu0 %v1416
    %v1435 = vpop.f32.mrf.mxu0
    %v1436 = vadd.f32 0.0, %v1435
    %1437 = vdwg.mxu0
    %1438 = vrot.lane.b32.xlu0 %v953, 80
    %v1439 = vpop.permute.xlu0 %1438
    %1440 = vrot.lane.b32.xlu0 %v956, 80
    %v1441 = vpop.permute.xlu0 %1440
    %v1445 = vsel %vm758, %v1408, 0
    %1447 = vmatpush.msra.mxu0 0.0
    %1448 = vmatpush.msra.mxu0 0.0
    %1449 = vmatpush.msra.mxu0 0.0
    %1450 = vmatpush.msra.mxu0 0.0
    %1451 = vmatpush.msra.mxu0 0.0
    %1452 = vmatpush.msra.mxu0 0.0
    %1453 = vmatpush.msra.mxu0 0.0
    %1454 = vmatpush.msra.mxu0 0.0
    %1455 = vmatpush.msra.mxu0 0.0
    %1456 = vmatpush.msra.mxu0 0.0
    %1457 = vmatpush.msra.mxu0 0.0
    %1458 = vmatpush.msra.mxu0 0.0
    %1459 = vmatpush.msra.mxu0 0.0
    %1460 = vmatpush.msra.mxu0 0.0
    %1461 = vmatpush.msra.mxu0 %v1441
    %1462 = vmatpush.msra.mxu0 %v1439
    %1463 = vmatmul.f32.gmra.mxu0 %v1445
    %v1464 = vpop.f32.mrf.mxu0
    %v1465 = vadd.f32 0.0, %v1464
    %1466 = vdwg.mxu0
    %1467 = vrot.lane.b32.xlu0 %v893, 104
    %v1468 = vpop.permute.xlu0 %1467
    %1469 = vrot.lane.b32.xlu0 %v947, 104
    %v1470 = vpop.permute.xlu0 %1469
    %1471 = vrot.lane.b32.xlu0 %v950, 104
    %v1472 = vpop.permute.xlu0 %1471
    %v1473 = vsel %vm112, %v1468, 0
    %v1475 = vsel %vm112, %v1470, 0
    %v1477 = vsel %vm112, %v1472, 0
    %1479 = vmatpush.xpose.msra.mxu0 0.0
    %1480 = vmatpush.xpose.msra.mxu0 0.0
    %1481 = vmatpush.xpose.msra.mxu0 0.0
    %1482 = vmatpush.xpose.msra.mxu0 0.0
    %1483 = vmatpush.xpose.msra.mxu0 0.0
    %1484 = vmatpush.xpose.msra.mxu0 0.0
    %1485 = vmatpush.xpose.msra.mxu0 0.0
    %1486 = vmatpush.xpose.msra.mxu0 0.0
    %1487 = vmatpush.xpose.msra.mxu0 0.0
    %1488 = vmatpush.xpose.msra.mxu0 0.0
    %1489 = vmatpush.xpose.msra.mxu0 0.0
    %1490 = vmatpush.xpose.msra.mxu0 0.0
    %1491 = vmatpush.xpose.msra.mxu0 0.0
    %1492 = vmatpush.xpose.msra.mxu0 0.0
    %1493 = vmatpush.xpose.msra.mxu0 %v1477
    %1494 = vmatpush.xpose.msra.mxu0 %v1475
    %1495 = vmatmul.f32.gmra.mxu0 %v1473
    %v1496 = vpop.f32.mrf.mxu0
    %v1497 = vadd.f32 0.0, %v1496
    %1498 = vdwg.mxu0
    %1499 = vrot.lane.b32.xlu0 %v896, 104
    %v1500 = vpop.permute.xlu0 %1499
    %1501 = vrot.lane.b32.xlu0 %v953, 104
    %v1502 = vpop.permute.xlu0 %1501
    %1503 = vrot.lane.b32.xlu0 %v956, 104
    %v1504 = vpop.permute.xlu0 %1503
    %v1505 = vsel %vm112, %v1500, 0
    %v1507 = vsel %vm112, %v1502, 0
    %v1509 = vsel %vm112, %v1504, 0
    %1511 = vmatpush.xpose.msra.mxu0 0.0
    %1512 = vmatpush.xpose.msra.mxu0 0.0
    %1513 = vmatpush.xpose.msra.mxu0 0.0
    %1514 = vmatpush.xpose.msra.mxu0 0.0
    %1515 = vmatpush.xpose.msra.mxu0 0.0
    %1516 = vmatpush.xpose.msra.mxu0 0.0
    %1517 = vmatpush.xpose.msra.mxu0 0.0
    %1518 = vmatpush.xpose.msra.mxu0 0.0
    %1519 = vmatpush.xpose.msra.mxu0 0.0
    %1520 = vmatpush.xpose.msra.mxu0 0.0
    %1521 = vmatpush.xpose.msra.mxu0 0.0
    %1522 = vmatpush.xpose.msra.mxu0 0.0
    %1523 = vmatpush.xpose.msra.mxu0 0.0
    %1524 = vmatpush.xpose.msra.mxu0 0.0
    %1525 = vmatpush.xpose.msra.mxu0 %v1509
    %1526 = vmatpush.xpose.msra.mxu0 %v1507
    %1527 = vmatmul.f32.gmra.mxu0 %v1505
    %v1528 = vpop.f32.mrf.mxu0
    %v1529 = vadd.f32 0.0, %v1528
    %1530 = vdwg.mxu0
    %v1531 = vsel %vm758, %v1497, -inf
    %1532 = vmax.xlane.f32.xlu0 %v1531
    %v1533 = vpop.xlane.xlu0 %1532
    %v1534 = vsel %vm758, %v1529, -inf
    %1535 = vmax.xlane.f32.xlu0 %v1534
    %v1536 = vpop.xlane.xlu0 %1535
    %v1537 = vsub.f32 %v1497, %v1533
    %v1538 = vsub.f32 %v1529, %v1536
    %v1539 = vmul.f32 %v1537, 1.442695
    %v1540 = vpow.pop %v1539
    %v1541 = vmul.f32 %v1538, 1.442695
    %v1542 = vpow.pop %v1541
    %v1543 = vsel %vm758, %v1540, 0.0
    %1544 = vadd.xlane.f32.xlu0 %v1543
    %v1545 = vpop.xlane.xlu0 %1544
    %v1546 = vsel %vm758, %v1542, 0.0
    %1547 = vadd.xlane.f32.xlu0 %v1546
    %v1548 = vpop.xlane.xlu0 %1547
    %v1549 = vrcp.pop %v1545
    %v1550 = vmul.f32 %v1545, %v1549
    %v1551 = vsub.f32 1.0, %v1550
    %v1552 = vmul.f32 %v1549, %v1551
    %v1553 = vadd.f32 %v1549, %v1552
    %vm1554 = vweird.f32 %v1545
    %vm1555 = vweird.f32 %v1549
    %vm1556 = vmor %vm1554, %vm1555
    %v1557 = vsel %vm1556, %v1549, %v1553
    %v1558 = vand.u32 2147483647, %v1545
    %vm1559 = vcmp.eq.f32.partialorder %v1558, 8.507059e+37
    %v1560 = vand.u32 %v1545, 2147483648
    %v1561 = vor.u32 1.1754944e-38, %v1560
    %v1562 = vsel %vm1559, %v1561, %v1557
    %v1563 = vmul.f32 %v1540, %v1562
    %v1564 = vrcp.pop %v1548
    %v1565 = vmul.f32 %v1548, %v1564
    %v1566 = vsub.f32 1.0, %v1565
    %v1567 = vmul.f32 %v1564, %v1566
    %v1568 = vadd.f32 %v1564, %v1567
    %vm1569 = vweird.f32 %v1548
    %vm1570 = vweird.f32 %v1564
    %vm1571 = vmor %vm1569, %vm1570
    %v1572 = vsel %vm1571, %v1564, %v1568
    %v1573 = vand.u32 2147483647, %v1548
    %vm1574 = vcmp.eq.f32.partialorder %v1573, 8.507059e+37
    %v1575 = vand.u32 %v1548, 2147483648
    %v1576 = vor.u32 1.1754944e-38, %v1575
    %v1577 = vsel %vm1574, %v1576, %v1572
    %v1578 = vmul.f32 %v1542, %v1577
    %1579 = vrot.lane.b32.xlu0 %v947, 72
    %v1580 = vpop.permute.xlu0 %1579
    %1581 = vrot.lane.b32.xlu0 %v950, 72
    %v1582 = vpop.permute.xlu0 %1581
    %v1586 = vsel %vm758, %v1563, 0
    %1588 = vmatpush.msra.mxu0 0.0
    %1589 = vmatpush.msra.mxu0 0.0
    %1590 = vmatpush.msra.mxu0 0.0
    %1591 = vmatpush.msra.mxu0 0.0
    %1592 = vmatpush.msra.mxu0 0.0
    %1593 = vmatpush.msra.mxu0 0.0
    %1594 = vmatpush.msra.mxu0 0.0
    %1595 = vmatpush.msra.mxu0 0.0
    %1596 = vmatpush.msra.mxu0 0.0
    %1597 = vmatpush.msra.mxu0 0.0
    %1598 = vmatpush.msra.mxu0 0.0
    %1599 = vmatpush.msra.mxu0 0.0
    %1600 = vmatpush.msra.mxu0 0.0
    %1601 = vmatpush.msra.mxu0 0.0
    %1602 = vmatpush.msra.mxu0 %v1582
    %1603 = vmatpush.msra.mxu0 %v1580
    %1604 = vmatmul.f32.gmra.mxu0 %v1586
    %v1605 = vpop.f32.mrf.mxu0
    %v1606 = vadd.f32 0.0, %v1605
    %1607 = vdwg.mxu0
    %1608 = vrot.lane.b32.xlu0 %v953, 72
    %v1609 = vpop.permute.xlu0 %1608
    %1610 = vrot.lane.b32.xlu0 %v956, 72
    %v1611 = vpop.permute.xlu0 %1610
    %v1615 = vsel %vm758, %v1578, 0
    %1617 = vmatpush.msra.mxu0 0.0
    %1618 = vmatpush.msra.mxu0 0.0
    %1619 = vmatpush.msra.mxu0 0.0
    %1620 = vmatpush.msra.mxu0 0.0
    %1621 = vmatpush.msra.mxu0 0.0
    %1622 = vmatpush.msra.mxu0 0.0
    %1623 = vmatpush.msra.mxu0 0.0
    %1624 = vmatpush.msra.mxu0 0.0
    %1625 = vmatpush.msra.mxu0 0.0
    %1626 = vmatpush.msra.mxu0 0.0
    %1627 = vmatpush.msra.mxu0 0.0
    %1628 = vmatpush.msra.mxu0 0.0
    %1629 = vmatpush.msra.mxu0 0.0
    %1630 = vmatpush.msra.mxu0 0.0
    %1631 = vmatpush.msra.mxu0 %v1611
    %1632 = vmatpush.msra.mxu0 %v1609
    %1633 = vmatmul.f32.gmra.mxu0 %v1615
    %v1634 = vpop.f32.mrf.mxu0
    %v1635 = vadd.f32 0.0, %v1634
    %1636 = vdwg.mxu0
    %1639 = vrot.lane.b32.xlu0 %v1266, 8
    %v1640 = vpop.permute.xlu0 %1639
    %1641 = vrot.lane.b32.xlu0 %v1295, 8
    %v1642 = vpop.permute.xlu0 %1641
    %1647 = vrot.lane.b32.xlu0 %v1436, 16
    %v1648 = vpop.permute.xlu0 %1647
    %1649 = vrot.lane.b32.xlu0 %v1465, 16
    %v1650 = vpop.permute.xlu0 %1649
    %1655 = vrot.lane.b32.xlu0 %v1606, 24
    %v1656 = vpop.permute.xlu0 %1655
    %1657 = vrot.lane.b32.xlu0 %v1635, 24
    %v1658 = vpop.permute.xlu0 %1657
    %v1661 = vsel %vm112, %v1096, %v1640
    %v1662 = vsel %vm112, %v1125, %v1642
    %v1663 = vsel %vm758, %v1661, %v1648
    %v1664 = vsel %vm758, %v1662, %v1650
    %v1665 = vsel %vm761, %v1663, %v1656
    %v1666 = vsel %vm761, %v1664, %v1658
    %v1668 = vperm.slane %v962, 0
    %v1671 = vsel %vm74, %v1665, 0
    %v1674 = vsel %vm74, %v1666, 0
    %1676 = vmatpush.msra.mxu0 0.0
    %1677 = vmatpush.msra.mxu0 0.0
    %1678 = vmatpush.msra.mxu0 0.0
    %1679 = vmatpush.msra.mxu0 0.0
    %1680 = vmatpush.msra.mxu0 0.0
    %1681 = vmatpush.msra.mxu0 0.0
    %1682 = vmatpush.msra.mxu0 0.0
    %1683 = vmatpush.msra.mxu0 0.0
    %1684 = vmatpush.msra.mxu0 0.0
    %1685 = vmatpush.msra.mxu0 0.0
    %1686 = vmatpush.msra.mxu0 0.0
    %1687 = vmatpush.msra.mxu0 0.0
    %1688 = vmatpush.msra.mxu0 %v961
    %1689 = vmatpush.msra.mxu0 %v960
    %1690 = vmatpush.msra.mxu0 %v959
    %1691 = vmatpush.msra.mxu0 %v958
    %1692 = vmatmul.f32.gmra.mxu0 %v1671
    %v1693 = vpop.f32.mrf.mxu0
    %v1694 = vadd.f32 %v1668, %v1693
    %1695 = vmatmul.f32.gmra.mxu0 %v1674
    %v1696 = vpop.f32.mrf.mxu0
    %v1697 = vadd.f32 %v1668, %v1696
    %1698 = vdwg.mxu0
    %v1699 = vadd.f32 %v859, %v1694
    %v1700 = vadd.f32 %v860, %v1697
    %v1701 = vld [vmem:[%s12] sm:$0x1]
    %v1702 = vld [vmem:[%s13] sm:$0x1]
    %v1703 = vsel %vm74, %v1699, 0.0
    %1704 = vadd.xlane.f32.xlu0 %v1703
    %v1705 = vpop.xlane.xlu0 %1704
    %v1706 = vsel %vm74, %v1700, 0.0
    %1707 = vadd.xlane.f32.xlu0 %v1706
    %v1708 = vpop.xlane.xlu0 %1707
    %v1709 = vmul.f32 %v1705, %v812
    %v1710 = vmul.f32 %v1708, %v812
    %v1711 = vsub.f32 %v1699, %v1709
    %v1712 = vsub.f32 %v1700, %v1710
    %v1713 = vmul.f32 %v1711, %v1711
    %v1714 = vmul.f32 %v1712, %v1712
    %v1715 = vsel %vm74, %v1713, 0.0
    %1716 = vadd.xlane.f32.xlu0 %v1715
    %v1717 = vpop.xlane.xlu0 %1716
    %v1718 = vsel %vm74, %v1714, 0.0
    %1719 = vadd.xlane.f32.xlu0 %v1718
    %v1720 = vpop.xlane.xlu0 %1719
    %v1721 = vmul.f32 %v1717, %v812
    %v1722 = vmul.f32 %v1720, %v812
    %v1723 = vadd.f32 %v1721, 1e-05
    %v1724 = vadd.f32 %v1722, 1e-05
    %v1725 = vrsqrt.pop %v1723
    %v1726 = vmul.f32 %v1725, %v1723
    %v1727 = vmul.f32 %v1726, %v1725
    %v1728 = vmul.f32 0.5, %v1727
    %v1729 = vsub.f32 1.5, %v1728
    %v1730 = vmul.f32 %v1725, %v1729
    %vm1731 = vweird.f32 %v1723
    %vm1732 = vweird.f32 %v1725
    %vm1733 = vmor %vm1731, %vm1732
    %v1734 = vsel %vm1733, %v1725, %v1730
    %v1735 = vrsqrt.pop %v1724
    %v1736 = vmul.f32 %v1735, %v1724
    %v1737 = vmul.f32 %v1736, %v1735
    %v1738 = vmul.f32 0.5, %v1737
    %v1739 = vsub.f32 1.5, %v1738
    %v1740 = vmul.f32 %v1735, %v1739
    %vm1741 = vweird.f32 %v1724
    %vm1742 = vweird.f32 %v1735
    %vm1743 = vmor %vm1741, %vm1742
    %v1744 = vsel %vm1743, %v1735, %v1740
    %v1745 = vmul.f32 %v1711, %v1734
    %v1746 = vmul.f32 %v1712, %v1744
    %v1748 = vperm.slane %v1701, 0
    %v1750 = vmul.f32 %v1745, %v1748
    %v1751 = vmul.f32 %v1746, %v1748
    %v1753 = vperm.slane %v1702, 0
    %v1755 = vadd.f32 %v1750, %v1753
    %v1756 = vadd.f32 %v1751, %v1753
    %v1757 = vld [vmem:[%s14] sm:$0xff]
    %v1758 = vld [vmem:[%s14 + $0x8] sm:$0xff]
    %v1759 = vld [vmem:[%s14 + $0x10] sm:$0xff]
    %v1760 = vld [vmem:[%s14 + $0x18] sm:$0xff]
    %v1761 = vld [vmem:[%s14 + $0x20] sm:$0xff]
    %v1762 = vld [vmem:[%s14 + $0x28] sm:$0xff]
    %v1763 = vld [vmem:[%s14 + $0x30] sm:$0xff]
    %v1764 = vld [vmem:[%s14 + $0x38] sm:$0xff]
    %v1765 = vld [vmem:[%s14 + $0x40] sm:$0xff]
    %v1766 = vld [vmem:[%s14 + $0x48] sm:$0xff]
    %v1767 = vld [vmem:[%s14 + $0x50] sm:$0xff]
    %v1768 = vld [vmem:[%s14 + $0x58] sm:$0xff]
    %v1769 = vld [vmem:[%s14 + $0x60] sm:$0xff]
    %v1770 = vld [vmem:[%s14 + $0x68] sm:$0xff]
    %v1771 = vld [vmem:[%s14 + $0x70] sm:$0xff]
    %v1772 = vld [vmem:[%s14 + $0x78] sm:$0xff]
    %v1773 = vld [vmem:[%s15] sm:$0xf]
    %v1775 = vperm.slane %v1773, 0
    %v1776 = vperm.slane %v1773, 1
    %v1777 = vperm.slane %v1773, 2
    %v1778 = vperm.slane %v1773, 3
    %v1784 = vsel %vm74, %v1755, 0
    %v1787 = vsel %vm74, %v1756, 0
    %1789 = vmatpush.msra.mxu0 0.0
    %1790 = vmatpush.msra.mxu0 0.0
    %1791 = vmatpush.msra.mxu0 0.0
    %1792 = vmatpush.msra.mxu0 0.0
    %1793 = vmatpush.msra.mxu0 0.0
    %1794 = vmatpush.msra.mxu0 0.0
    %1795 = vmatpush.msra.mxu0 0.0
    %1796 = vmatpush.msra.mxu0 0.0
    %1797 = vmatpush.msra.mxu0 0.0
    %1798 = vmatpush.msra.mxu0 0.0
    %1799 = vmatpush.msra.mxu0 0.0
    %1800 = vmatpush.msra.mxu0 0.0
    %1801 = vmatpush.msra.mxu0 %v1769
    %1802 = vmatpush.msra.mxu0 %v1765
    %1803 = vmatpush.msra.mxu0 %v1761
    %1804 = vmatpush.msra.mxu0 %v1757
    %1805 = vmatmul.f32.gmra.mxu0 %v1784
    %v1806 = vpop.f32.mrf.mxu0
    %v1807 = vadd.f32 %v1775, %v1806
    %1808 = vmatmul.f32.gmra.mxu0 %v1787
    %v1809 = vpop.f32.mrf.mxu0
    %v1810 = vadd.f32 %v1775, %v1809
    %1811 = vdwg.mxu0
    %1812 = vmatpush.msra.mxu0 0.0
    %1813 = vmatpush.msra.mxu0 0.0
    %1814 = vmatpush.msra.mxu0 0.0
    %1815 = vmatpush.msra.mxu0 0.0
    %1816 = vmatpush.msra.mxu0 0.0
    %1817 = vmatpush.msra.mxu0 0.0
    %1818 = vmatpush.msra.mxu0 0.0
    %1819 = vmatpush.msra.mxu0 0.0
    %1820 = vmatpush.msra.mxu0 0.0
    %1821 = vmatpush.msra.mxu0 0.0
    %1822 = vmatpush.msra.mxu0 0.0
    %1823 = vmatpush.msra.mxu0 0.0
    %1824 = vmatpush.msra.mxu0 %v1770
    %1825 = vmatpush.msra.mxu0 %v1766
    %1826 = vmatpush.msra.mxu0 %v1762
    %1827 = vmatpush.msra.mxu0 %v1758
    %1828 = vmatmul.f32.gmra.mxu0 %v1784
    %v1829 = vpop.f32.mrf.mxu0
    %v1830 = vadd.f32 %v1776, %v1829
    %1831 = vmatmul.f32.gmra.mxu0 %v1787
    %v1832 = vpop.f32.mrf.mxu0
    %v1833 = vadd.f32 %v1776, %v1832
    %1834 = vdwg.mxu0
    %1835 = vmatpush.msra.mxu0 0.0
    %1836 = vmatpush.msra.mxu0 0.0
    %1837 = vmatpush.msra.mxu0 0.0
    %1838 = vmatpush.msra.mxu0 0.0
    %1839 = vmatpush.msra.mxu0 0.0
    %1840 = vmatpush.msra.mxu0 0.0
    %1841 = vmatpush.msra.mxu0 0.0
    %1842 = vmatpush.msra.mxu0 0.0
    %1843 = vmatpush.msra.mxu0 0.0
    %1844 = vmatpush.msra.mxu0 0.0
    %1845 = vmatpush.msra.mxu0 0.0
    %1846 = vmatpush.msra.mxu0 0.0
    %1847 = vmatpush.msra.mxu0 %v1771
    %1848 = vmatpush.msra.mxu0 %v1767
    %1849 = vmatpush.msra.mxu0 %v1763
    %1850 = vmatpush.msra.mxu0 %v1759
    %1851 = vmatmul.f32.gmra.mxu0 %v1784
    %v1852 = vpop.f32.mrf.mxu0
    %v1853 = vadd.f32 %v1777, %v1852
    %1854 = vmatmul.f32.gmra.mxu0 %v1787
    %v1855 = vpop.f32.mrf.mxu0
    %v1856 = vadd.f32 %v1777, %v1855
    %1857 = vdwg.mxu0
    %1858 = vmatpush.msra.mxu0 0.0
    %1859 = vmatpush.msra.mxu0 0.0
    %1860 = vmatpush.msra.mxu0 0.0
    %1861 = vmatpush.msra.mxu0 0.0
    %1862 = vmatpush.msra.mxu0 0.0
    %1863 = vmatpush.msra.mxu0 0.0
    %1864 = vmatpush.msra.mxu0 0.0
    %1865 = vmatpush.msra.mxu0 0.0
    %1866 = vmatpush.msra.mxu0 0.0
    %1867 = vmatpush.msra.mxu0 0.0
    %1868 = vmatpush.msra.mxu0 0.0
    %1869 = vmatpush.msra.mxu0 0.0
    %1870 = vmatpush.msra.mxu0 %v1772
    %1871 = vmatpush.msra.mxu0 %v1768
    %1872 = vmatpush.msra.mxu0 %v1764
    %1873 = vmatpush.msra.mxu0 %v1760
    %1874 = vmatmul.f32.gmra.mxu0 %v1784
    %v1875 = vpop.f32.mrf.mxu0
    %v1876 = vadd.f32 %v1778, %v1875
    %1877 = vmatmul.f32.gmra.mxu0 %v1787
    %v1878 = vpop.f32.mrf.mxu0
    %v1879 = vadd.f32 %v1778, %v1878
    %1880 = vdwg.mxu0
    %v1881 = vmax.f32 %v1807, 0.0
    %v1882 = vmax.f32 %v1830, 0.0
    %v1883 = vmax.f32 %v1853, 0.0
    %v1884 = vmax.f32 %v1876, 0.0
    %v1885 = vmax.f32 %v1810, 0.0
    %v1886 = vmax.f32 %v1833, 0.0
    %v1887 = vmax.f32 %v1856, 0.0
    %v1888 = vmax.f32 %v1879, 0.0
    %v1889 = vld [vmem:[%s16] sm:$0xff]
    %v1890 = vld [vmem:[%s16 + $0x8] sm:$0xff]
    %v1891 = vld [vmem:[%s16 + $0x10] sm:$0xff]
    %v1892 = vld [vmem:[%s16 + $0x18] sm:$0xff]
    %v1893 = vld [vmem:[%s16 + $0x20] sm:$0xff]
    %v1894 = vld [vmem:[%s16 + $0x28] sm:$0xff]
    %v1895 = vld [vmem:[%s16 + $0x30] sm:$0xff]
    %v1896 = vld [vmem:[%s16 + $0x38] sm:$0xff]
    %v1897 = vld [vmem:[%s16 + $0x40] sm:$0xff]
    %v1898 = vld [vmem:[%s16 + $0x48] sm:$0xff]
    %v1899 = vld [vmem:[%s16 + $0x50] sm:$0xff]
    %v1900 = vld [vmem:[%s16 + $0x58] sm:$0xff]
    %v1901 = vld [vmem:[%s16 + $0x60] sm:$0xff]
    %v1902 = vld [vmem:[%s16 + $0x68] sm:$0xff]
    %v1903 = vld [vmem:[%s16 + $0x70] sm:$0xff]
    %v1904 = vld [vmem:[%s16 + $0x78] sm:$0xff]
    %v1905 = vld [vmem:[%s16 + $0x80] sm:$0xff]
    %v1906 = vld [vmem:[%s16 + $0x88] sm:$0xff]
    %v1907 = vld [vmem:[%s16 + $0x90] sm:$0xff]
    %v1908 = vld [vmem:[%s16 + $0x98] sm:$0xff]
    %v1909 = vld [vmem:[%s16 + $0xa0] sm:$0xff]
    %v1910 = vld [vmem:[%s16 + $0xa8] sm:$0xff]
    %v1911 = vld [vmem:[%s16 + $0xb0] sm:$0xff]
    %v1912 = vld [vmem:[%s16 + $0xb8] sm:$0xff]
    %v1913 = vld [vmem:[%s16 + $0xc0] sm:$0xff]
    %v1914 = vld [vmem:[%s16 + $0xc8] sm:$0xff]
    %v1915 = vld [vmem:[%s16 + $0xd0] sm:$0xff]
    %v1916 = vld [vmem:[%s16 + $0xd8] sm:$0xff]
    %v1917 = vld [vmem:[%s16 + $0xe0] sm:$0xff]
    %v1918 = vld [vmem:[%s16 + $0xe8] sm:$0xff]
    %v1919 = vld [vmem:[%s16 + $0xf0] sm:$0xff]
    %v1920 = vld [vmem:[%s16 + $0xf8] sm:$0xff]
    %v1921 = vld [vmem:[%s16 + $0x100] sm:$0xff]
    %v1922 = vld [vmem:[%s16 + $0x108] sm:$0xff]
    %v1923 = vld [vmem:[%s16 + $0x110] sm:$0xff]
    %v1924 = vld [vmem:[%s16 + $0x118] sm:$0xff]
    %v1925 = vld [vmem:[%s16 + $0x120] sm:$0xff]
    %v1926 = vld [vmem:[%s16 + $0x128] sm:$0xff]
    %v1927 = vld [vmem:[%s16 + $0x130] sm:$0xff]
    %v1928 = vld [vmem:[%s16 + $0x138] sm:$0xff]
    %v1929 = vld [vmem:[%s16 + $0x140] sm:$0xff]
    %v1930 = vld [vmem:[%s16 + $0x148] sm:$0xff]
    %v1931 = vld [vmem:[%s16 + $0x150] sm:$0xff]
    %v1932 = vld [vmem:[%s16 + $0x158] sm:$0xff]
    %v1933 = vld [vmem:[%s16 + $0x160] sm:$0xff]
    %v1934 = vld [vmem:[%s16 + $0x168] sm:$0xff]
    %v1935 = vld [vmem:[%s16 + $0x170] sm:$0xff]
    %v1936 = vld [vmem:[%s16 + $0x178] sm:$0xff]
    %v1937 = vld [vmem:[%s16 + $0x180] sm:$0xff]
    %v1938 = vld [vmem:[%s16 + $0x188] sm:$0xff]
    %v1939 = vld [vmem:[%s16 + $0x190] sm:$0xff]
    %v1940 = vld [vmem:[%s16 + $0x198] sm:$0xff]
    %v1941 = vld [vmem:[%s16 + $0x1a0] sm:$0xff]
    %v1942 = vld [vmem:[%s16 + $0x1a8] sm:$0xff]
    %v1943 = vld [vmem:[%s16 + $0x1b0] sm:$0xff]
    %v1944 = vld [vmem:[%s16 + $0x1b8] sm:$0xff]
    %v1945 = vld [vmem:[%s16 + $0x1c0] sm:$0xff]
    %v1946 = vld [vmem:[%s16 + $0x1c8] sm:$0xff]
    %v1947 = vld [vmem:[%s16 + $0x1d0] sm:$0xff]
    %v1948 = vld [vmem:[%s16 + $0x1d8] sm:$0xff]
    %v1949 = vld [vmem:[%s16 + $0x1e0] sm:$0xff]
    %v1950 = vld [vmem:[%s16 + $0x1e8] sm:$0xff]
    %v1951 = vld [vmem:[%s16 + $0x1f0] sm:$0xff]
    %v1952 = vld [vmem:[%s16 + $0x1f8] sm:$0xff]
    %v1953 = vld [vmem:[%s17] sm:$0x1]
    %v1955 = vperm.slane %v1953, 0
    %1957 = vmatpush.msra.mxu0 %v1904
    %1958 = vmatpush.msra.mxu0 %v1903
    %1959 = vmatpush.msra.mxu0 %v1902
    %1960 = vmatpush.msra.mxu0 %v1901
    %1961 = vmatpush.msra.mxu0 %v1900
    %1962 = vmatpush.msra.mxu0 %v1899
    %1963 = vmatpush.msra.mxu0 %v1898
    %1964 = vmatpush.msra.mxu0 %v1897
    %1965 = vmatpush.msra.mxu0 %v1896
    %1966 = vmatpush.msra.mxu0 %v1895
    %1967 = vmatpush.msra.mxu0 %v1894
    %1968 = vmatpush.msra.mxu0 %v1893
    %1969 = vmatpush.msra.mxu0 %v1892
    %1970 = vmatpush.msra.mxu0 %v1891
    %1971 = vmatpush.msra.mxu0 %v1890
    %1972 = vmatpush.msra.mxu0 %v1889
    %1973 = vmatmul.f32.gmra.mxu0 %v1881
    %v1974 = vpop.f32.mrf.mxu0
    %v1975 = vadd.f32 %v1955, %v1974
    %1976 = vmatmul.f32.gmra.mxu0 %v1885
    %v1977 = vpop.f32.mrf.mxu0
    %v1978 = vadd.f32 %v1955, %v1977
    %1979 = vdwg.mxu0
    %1980 = vmatpush.msra.mxu0 %v1920
    %1981 = vmatpush.msra.mxu0 %v1919
    %1982 = vmatpush.msra.mxu0 %v1918
    %1983 = vmatpush.msra.mxu0 %v1917
    %1984 = vmatpush.msra.mxu0 %v1916
    %1985 = vmatpush.msra.mxu0 %v1915
    %1986 = vmatpush.msra.mxu0 %v1914
    %1987 = vmatpush.msra.mxu0 %v1913
    %1988 = vmatpush.msra.mxu0 %v1912
    %1989 = vmatpush.msra.mxu0 %v1911
    %1990 = vmatpush.msra.mxu0 %v1910
    %1991 = vmatpush.msra.mxu0 %v1909
    %1992 = vmatpush.msra.mxu0 %v1908
    %1993 = vmatpush.msra.mxu0 %v1907
    %1994 = vmatpush.msra.mxu0 %v1906
    %1995 = vmatpush.msra.mxu0 %v1905
    %1996 = vmatmul.f32.gmra.mxu0 %v1882
    %v1997 = vpop.f32.mrf.mxu0
    %v1998 = vadd.f32 %v1975, %v1997
    %1999 = vmatmul.f32.gmra.mxu0 %v1886
    %v2000 = vpop.f32.mrf.mxu0
    %v2001 = vadd.f32 %v1978, %v2000
    %2002 = vdwg.mxu0
    %2003 = vmatpush.msra.mxu0 %v1936
    %2004 = vmatpush.msra.mxu0 %v1935
    %2005 = vmatpush.msra.mxu0 %v1934
    %2006 = vmatpush.msra.mxu0 %v1933
    %2007 = vmatpush.msra.mxu0 %v1932
    %2008 = vmatpush.msra.mxu0 %v1931
    %2009 = vmatpush.msra.mxu0 %v1930
    %2010 = vmatpush.msra.mxu0 %v1929
    %2011 = vmatpush.msra.mxu0 %v1928
    %2012 = vmatpush.msra.mxu0 %v1927
    %2013 = vmatpush.msra.mxu0 %v1926
    %2014 = vmatpush.msra.mxu0 %v1925
    %2015 = vmatpush.msra.mxu0 %v1924
    %2016 = vmatpush.msra.mxu0 %v1923
    %2017 = vmatpush.msra.mxu0 %v1922
    %2018 = vmatpush.msra.mxu0 %v1921
    %2019 = vmatmul.f32.gmra.mxu0 %v1883
    %v2020 = vpop.f32.mrf.mxu0
    %v2021 = vadd.f32 %v1998, %v2020
    %2022 = vmatmul.f32.gmra.mxu0 %v1887
    %v2023 = vpop.f32.mrf.mxu0
    %v2024 = vadd.f32 %v2001, %v2023
    %2025 = vdwg.mxu0
    %2026 = vmatpush.msra.mxu0 %v1952
    %2027 = vmatpush.msra.mxu0 %v1951
    %2028 = vmatpush.msra.mxu0 %v1950
    %2029 = vmatpush.msra.mxu0 %v1949
    %2030 = vmatpush.msra.mxu0 %v1948
    %2031 = vmatpush.msra.mxu0 %v1947
    %2032 = vmatpush.msra.mxu0 %v1946
    %2033 = vmatpush.msra.mxu0 %v1945
    %2034 = vmatpush.msra.mxu0 %v1944
    %2035 = vmatpush.msra.mxu0 %v1943
    %2036 = vmatpush.msra.mxu0 %v1942
    %2037 = vmatpush.msra.mxu0 %v1941
    %2038 = vmatpush.msra.mxu0 %v1940
    %2039 = vmatpush.msra.mxu0 %v1939
    %2040 = vmatpush.msra.mxu0 %v1938
    %2041 = vmatpush.msra.mxu0 %v1937
    %2042 = vmatmul.f32.gmra.mxu0 %v1884
    %v2043 = vpop.f32.mrf.mxu0
    %v2044 = vadd.f32 %v2021, %v2043
    %2045 = vmatmul.f32.gmra.mxu0 %v1888
    %v2046 = vpop.f32.mrf.mxu0
    %v2047 = vadd.f32 %v2024, %v2046
    %2048 = vdwg.mxu0
    %vm2049 = vcmask 523264
    %2050 = vst.msk [vmem:[#allocation2] sm:$0xff] %vm2049, %v2044
    %2051 = vst.msk [vmem:[#allocation2 + $0x8] sm:$0xff] %vm2049, %v2047
    // Predicated region
    $region74: #{tpu_custom_call.1} parent=1 // pred_check
      _
    $region75: #{tpu_custom_call.1} parent=1 // pred_check_branch
      %2053 = sbr.rel (0) target = $region77
    $region76: #{tpu_custom_call.1} parent=1 // pred_region
      %2055 = vsyncadd [#allocation3], 0
      %s2056 = sshll.u32 [#allocation2], 4
      %s2057 = int_to_ptr.vmem [resolvable:$true] %s2056
      %s2058 = sshll.u32 %s18, 4
      %s2059 = int_to_ptr.hbm [resolvable:$true] %s2058
      %2064 = dma.vmem_to_hbm [thread:$0]  %s2057, 256, %s2059, [#allocation3], 128, 128, 8
    $region77: #{tpu_custom_call.1} parent=1 // pred_fallthru
      _
    // Predicated region
    $region78: #{tpu_custom_call.1} parent=1 // pred_check
      _
    $region79: #{tpu_custom_call.1} parent=1 // pred_check_branch
      %2066 = sbr.rel (0) target = $region81
    $region80: #{tpu_custom_call.1} parent=1 // pred_region
      %2068 = dma.done [#allocation3], 256
    $region81: #{tpu_custom_call.1} parent=1 // pred_fallthru
      _
    %2069 = vsyncpa [#allocation3], 1

</llo_original>
